<compile_context>
chip_gen: v7x
topology: tpu7x:2x2x1
jax: 0.10.0
libtpu: 0.0.40
codegen_flags: <defaults>
</compile_context>

<pallas_src>
import functools

import jax
import jax.numpy as jnp
from jax import lax
from jax.experimental import pallas as pl
from jax.experimental.pallas import tpu as pltpu

HIDDEN_SIZE = 50
INPUT_SIZE = 20
NUM_CLASSES = 10
NUM_LAYERS = 1

# Padded (TPU-friendly) sizes.
HP = 128    # hidden padded: each gate slab == one full 128-lane vreg
IP = 32     # input padded: sublane-aligned contraction dim
CP = 128    # logits padded: unmasked final store


def lstmnet_kernel(x_ref, wih_ref, whh_ref, b_ref, wfc_ref, bfc_ref, out_ref,
                   gx_ref, *, seq_len: int, batch: int, hidden: int):
    """Whole forward (LSTM recurrence + relu + fc2) in one kernel.

    x_ref   : (T*Bp, Ip)      time-major, batch-flattened, zero-padded input
    wih_ref : (Ip, 4*Hp)      fused input->hidden weights, gate order (i, f, g, o)
    whh_ref : (Hp, 4*Hp)      fused hidden->hidden weights
    b_ref   : (1, 4*Hp)       combined bias (b_ih + b_hh), zero in padded lanes
    wfc_ref : (Hp, Cp)        fc2 weight (transposed, zero-padded)
    bfc_ref : (1, Cp)         fc2 bias (zero-padded)
    out_ref : (Bp, Cp)        padded logits
    gx_ref  : (T*Bp, 4*Hp)    VMEM scratch for the hoisted input projection
    """
    T, Bp, Hp = seq_len, batch, hidden

    # ---- pre-loop: input projection for ALL timesteps at once ------------
    # One large MXU matmul with bias folded in; stored to VMEM scratch so the
    # unrolled recurrence below only keeps (Bp, 4*Hp)-sized values live.
    gx_ref[...] = (jnp.dot(x_ref[...], wih_ref[...],
                           preferred_element_type=jnp.float32) + b_ref[...])

    h = jnp.zeros((Bp, Hp), jnp.float32)                  # h_0 = 0
    c = jnp.zeros((Bp, Hp), jnp.float32)                  # c_0 = 0

    # ---- recurrence: statically unrolled, one fused matmul per step ------
    for t in range(T):
        # Static sublane-aligned row slice of the precomputed projection.
        gates = gx_ref[t * Bp:(t + 1) * Bp, :] + jnp.dot(
            h, whh_ref[...], preferred_element_type=jnp.float32)  # (Bp, 4*Hp)
        i_g = jax.nn.sigmoid(gates[:, 0 * Hp:1 * Hp])     # lane-aligned slabs
        f_g = jax.nn.sigmoid(gates[:, 1 * Hp:2 * Hp])
        g_g = jnp.tanh(gates[:, 2 * Hp:3 * Hp])
        o_g = jax.nn.sigmoid(gates[:, 3 * Hp:4 * Hp])
        c = f_g * c + i_g * g_g
        h = o_g * jnp.tanh(c)

    # ---- head: hn -> relu -> fc2 ------------------------------------------
    # dropout(hn) and fc1(relu(hn)) are dead in the original forward: omitted.
    relu_h = jnp.maximum(h, 0.0)
    out_ref[...] = (jnp.dot(relu_h, wfc_ref[...],
                            preferred_element_type=jnp.float32)
                    + bfc_ref[...])


def init_params(key):
    """Deterministic parameter init mirroring PyTorch default shapes/ranges."""
    ks = jax.random.split(key, 8)
    H, I, C = HIDDEN_SIZE, INPUT_SIZE, NUM_CLASSES
    bound = 1.0 / jnp.sqrt(jnp.float32(H))

    # LSTM params, gate order (i, f, g, o) as in nn.LSTM
    w_ih = jax.random.uniform(ks[0], (4 * H, I), jnp.float32, -bound, bound)
    w_hh = jax.random.uniform(ks[1], (4 * H, H), jnp.float32, -bound, bound)
    b_ih = jax.random.uniform(ks[2], (4 * H,), jnp.float32, -bound, bound)
    b_hh = jax.random.uniform(ks[3], (4 * H,), jnp.float32, -bound, bound)

    fcb = 1.0 / jnp.sqrt(jnp.float32(H * NUM_LAYERS))
    w_fc1 = jax.random.uniform(ks[4], (C, H), jnp.float32, -fcb, fcb)  # dead in fwd
    b_fc1 = jax.random.uniform(ks[5], (C,), jnp.float32, -fcb, fcb)    # dead in fwd
    w_fc2 = jax.random.uniform(ks[6], (C, H), jnp.float32, -fcb, fcb)
    b_fc2 = jax.random.uniform(ks[7], (C,), jnp.float32, -fcb, fcb)

    return dict(w_ih=w_ih, w_hh=w_hh, b_ih=b_ih, b_hh=b_hh,
                w_fc1=w_fc1, b_fc1=b_fc1, w_fc2=w_fc2, b_fc2=b_fc2)


def lstmnet_forward(x, params):
    """x: (B, T, I) batch_first, float32 — same convention as the nn.Module."""
    B, T, I = x.shape
    H, C = HIDDEN_SIZE, NUM_CLASSES
    assert I == INPUT_SIZE
    Hp, Ip, Cp = HP, IP, CP
    Bp = ((B + 7) // 8) * 8                      # sublane-aligned batch

    # ---- layout glue / zero-padding (all outside the kernel) -------------
    # time-major, batch-flattened, padded input: (T*Bp, Ip)
    x_tm = jnp.transpose(x, (1, 0, 2)).astype(jnp.float32)          # (T, B, I)
    x_tm = jnp.pad(x_tm, ((0, 0), (0, Bp - B), (0, Ip - I)))
    x_flat = x_tm.reshape(T * Bp, Ip)

    # fused, padded input->hidden weights: (Ip, 4*Hp) with gate blocks
    # [i | f | g | o]; padded rows/cols are zero.
    w_ih = params["w_ih"].reshape(4, H, I)
    wih_pad = jnp.zeros((4, Hp, Ip), jnp.float32).at[:, :H, :I].set(w_ih)
    wih_cat = jnp.transpose(wih_pad, (2, 0, 1)).reshape(Ip, 4 * Hp)

    # fused, padded hidden->hidden weights: (Hp, 4*Hp)
    w_hh = params["w_hh"].reshape(4, H, H)
    whh_pad = jnp.zeros((4, Hp, Hp), jnp.float32).at[:, :H, :H].set(w_hh)
    whh_cat = jnp.transpose(whh_pad, (2, 0, 1)).reshape(Hp, 4 * Hp)

    # combined bias (b_ih + b_hh), zero in padded lanes: (1, 4*Hp)
    b = (params["b_ih"] + params["b_hh"]).reshape(4, H)
    b_cat = jnp.zeros((4, Hp), jnp.float32).at[:, :H].set(b).reshape(1, 4 * Hp)

    # fc2 weight/bias, padded: (Hp, Cp), (1, Cp)
    wfc = jnp.zeros((Hp, Cp), jnp.float32).at[:H, :C].set(params["w_fc2"].T)
    bfc = jnp.zeros((1, Cp), jnp.float32).at[0, :C].set(params["b_fc2"])

    kernel = functools.partial(lstmnet_kernel, seq_len=T, batch=Bp, hidden=Hp)
    vmem = pl.BlockSpec(memory_space=pltpu.MemorySpace.VMEM)
    out_pad = pl.pallas_call(
        kernel,
        out_shape=jax.ShapeDtypeStruct((Bp, Cp), jnp.float32),
        in_specs=[vmem] * 6,
        out_specs=vmem,
        scratch_shapes=[pltpu.VMEM((T * Bp, 4 * Hp), jnp.float32)],
        compiler_params=pltpu.CompilerParams(
            vmem_limit_bytes=32 * 1024 * 1024),
    )(x_flat, wih_cat, whh_cat, b_cat, wfc, bfc)

    return out_pad[:B, :C]


def lstmnet_reference(x, params):
    """Pure-JAX reference of the same forward, for validation."""
    B, T, I = x.shape
    H = HIDDEN_SIZE
    w_ih, w_hh = params["w_ih"], params["w_hh"]
    b = params["b_ih"] + params["b_hh"]

    def cell(carry, x_t):
        h, c = carry
        gates = x_t @ w_ih.T + h @ w_hh.T + b            # (B, 4H)
        i_g = jax.nn.sigmoid(gates[:, 0 * H:1 * H])
        f_g = jax.nn.sigmoid(gates[:, 1 * H:2 * H])
        g_g = jnp.tanh(gates[:, 2 * H:3 * H])
        o_g = jax.nn.sigmoid(gates[:, 3 * H:4 * H])
        c_new = f_g * c + i_g * g_g
        h_new = o_g * jnp.tanh(c_new)
        return (h_new, c_new), None

    h0 = jnp.zeros((B, H), jnp.float32)
    c0 = jnp.zeros((B, H), jnp.float32)
    (hn, _), _ = lax.scan(cell, (h0, c0), jnp.transpose(x, (1, 0, 2)))
    relu_hn = jnp.maximum(hn, 0.0)
    return relu_hn @ params["w_fc2"].T + params["b_fc2"]


if __name__ == "__main__":
    key = jax.random.PRNGKey(0)
    k_param, k_x = jax.random.split(key)

    B, T = 2, 8
    params = init_params(k_param)
    x = jax.random.normal(k_x, (B, T, INPUT_SIZE), jnp.float32)

    out = lstmnet_forward(x, params)
    out = jax.block_until_ready(out)

    ref = lstmnet_reference(x, params)
    assert out.shape == (B, NUM_CLASSES)
    assert jnp.allclose(out, ref, atol=1e-5, rtol=1e-5), "mismatch vs reference"

    print("KERNEL_OK")
</pallas_src>

<mosaic_0001>
module attributes {stable_mosaic.version = 11 : i64} {
  func.func @lstmnet_kernel(%arg0: memref<64x32xf32, #tpu.memory_space<vmem>>, %arg1: memref<32x512xf32, #tpu.memory_space<vmem>>, %arg2: memref<128x512xf32, #tpu.memory_space<vmem>>, %arg3: memref<1x512xf32, #tpu.memory_space<vmem>>, %arg4: memref<128x128xf32, #tpu.memory_space<vmem>>, %arg5: memref<1x128xf32, #tpu.memory_space<vmem>>, %arg6: memref<8x128xf32, #tpu.memory_space<vmem>>, %arg7: memref<64x512xf32, #tpu.memory_space<vmem>>) attributes {dimension_semantics = [], scalar_prefetch = 0 : i64, scratch_operands = 1 : i64, tpu.core_type = #tpu.core_type<tc>} {
    %c0 = arith.constant 0 : index
    %c0_0 = arith.constant 0 : index
    %0 = vector.load %arg0[%c0, %c0_0] : memref<64x32xf32, #tpu.memory_space<vmem>>, vector<64x32xf32>
    %c0_1 = arith.constant 0 : index
    %c0_2 = arith.constant 0 : index
    %1 = vector.load %arg1[%c0_1, %c0_2] : memref<32x512xf32, #tpu.memory_space<vmem>>, vector<32x512xf32>
    %cst = arith.constant dense<0.000000e+00> : vector<64x512xf32>
    %2 = tpu.matmul %0, %1, %cst {dimension_numbers = #tpu.dot_dimension_numbers<[1], [0], [0], [1], [0, 0, 1, 1], [], []>} : vector<64x32xf32>, vector<32x512xf32>, vector<64x512xf32> -> vector<64x512xf32>
    %c0_3 = arith.constant 0 : index
    %c0_4 = arith.constant 0 : index
    %3 = vector.load %arg3[%c0_3, %c0_4] : memref<1x512xf32, #tpu.memory_space<vmem>>, vector<1x512xf32>
    %4 = vector.broadcast %3 : vector<1x512xf32> to vector<64x512xf32>
    %5 = arith.addf %2, %4 : vector<64x512xf32>
    %c0_5 = arith.constant 0 : index
    %c0_6 = arith.constant 0 : index
    %6 = vector.load %arg7[%c0_5, %c0_6] : memref<64x512xf32, #tpu.memory_space<vmem>>, vector<64x512xf32>
    tpu.vector_store %arg7[%c0_5, %c0_6], %5 {strides = array<i32>} : memref<64x512xf32, #tpu.memory_space<vmem>>, vector<64x512xf32>,
    %cst_7 = arith.constant 0.000000e+00 : f32
    %7 = vector.broadcast %cst_7 : f32 to vector<8x128xf32>
    %cst_8 = arith.constant 0.000000e+00 : f32
    %8 = vector.broadcast %cst_8 : f32 to vector<8x128xf32>
    %c0_9 = arith.constant 0 : index
    %c0_10 = arith.constant 0 : index
    %9 = vector.load %arg7[%c0_9, %c0_10] : memref<64x512xf32, #tpu.memory_space<vmem>>, vector<8x512xf32>
    %c0_11 = arith.constant 0 : index
    %c0_12 = arith.constant 0 : index
    %10 = vector.load %arg2[%c0_11, %c0_12] : memref<128x512xf32, #tpu.memory_space<vmem>>, vector<128x512xf32>
    %cst_13 = arith.constant dense<0.000000e+00> : vector<8x512xf32>
    %11 = tpu.matmul %7, %10, %cst_13 {dimension_numbers = #tpu.dot_dimension_numbers<[1], [0], [0], [1], [0, 0, 1, 1], [], []>} : vector<8x128xf32>, vector<128x512xf32>, vector<8x512xf32> -> vector<8x512xf32>
    %12 = arith.addf %9, %11 : vector<8x512xf32>
    %13 = vector.extract_strided_slice %12 {offsets = [0, 0], sizes = [8, 128], strides = [1, 1]} : vector<8x512xf32> to vector<8x128xf32>
    %14 = arith.negf %13 : vector<8x128xf32>
    %15 = math.exp %14 : vector<8x128xf32>
    %cst_14 = arith.constant 1.000000e+00 : f32
    %16 = vector.broadcast %cst_14 : f32 to vector<8x128xf32>
    %17 = arith.addf %16, %15 : vector<8x128xf32>
    %18 = arith.divf %16, %17 : vector<8x128xf32>
    %19 = vector.extract_strided_slice %12 {offsets = [0, 128], sizes = [8, 128], strides = [1, 1]} : vector<8x512xf32> to vector<8x128xf32>
    %20 = arith.negf %19 : vector<8x128xf32>
    %21 = math.exp %20 : vector<8x128xf32>
    %cst_15 = arith.constant 1.000000e+00 : f32
    %22 = vector.broadcast %cst_15 : f32 to vector<8x128xf32>
    %23 = arith.addf %22, %21 : vector<8x128xf32>
    %24 = arith.divf %22, %23 : vector<8x128xf32>
    %25 = vector.extract_strided_slice %12 {offsets = [0, 256], sizes = [8, 128], strides = [1, 1]} : vector<8x512xf32> to vector<8x128xf32>
    %26 = math.tanh %25 : vector<8x128xf32>
    %27 = vector.extract_strided_slice %12 {offsets = [0, 384], sizes = [8, 128], strides = [1, 1]} : vector<8x512xf32> to vector<8x128xf32>
    %28 = arith.negf %27 : vector<8x128xf32>
    %29 = math.exp %28 : vector<8x128xf32>
    %cst_16 = arith.constant 1.000000e+00 : f32
    %30 = vector.broadcast %cst_16 : f32 to vector<8x128xf32>
    %31 = arith.addf %30, %29 : vector<8x128xf32>
    %32 = arith.divf %30, %31 : vector<8x128xf32>
    %33 = arith.mulf %24, %8 : vector<8x128xf32>
    %34 = arith.mulf %18, %26 : vector<8x128xf32>
    %35 = arith.addf %33, %34 : vector<8x128xf32>
    %36 = math.tanh %35 : vector<8x128xf32>
    %37 = arith.mulf %32, %36 : vector<8x128xf32>
    %c8 = arith.constant 8 : index
    %c0_17 = arith.constant 0 : index
    %38 = vector.load %arg7[%c8, %c0_17] : memref<64x512xf32, #tpu.memory_space<vmem>>, vector<8x512xf32>
    %c0_18 = arith.constant 0 : index
    %c0_19 = arith.constant 0 : index
    %39 = vector.load %arg2[%c0_18, %c0_19] : memref<128x512xf32, #tpu.memory_space<vmem>>, vector<128x512xf32>
    %cst_20 = arith.constant dense<0.000000e+00> : vector<8x512xf32>
    %40 = tpu.matmul %37, %39, %cst_20 {dimension_numbers = #tpu.dot_dimension_numbers<[1], [0], [0], [1], [0, 0, 1, 1], [], []>} : vector<8x128xf32>, vector<128x512xf32>, vector<8x512xf32> -> vector<8x512xf32>
    %41 = arith.addf %38, %40 : vector<8x512xf32>
    %42 = vector.extract_strided_slice %41 {offsets = [0, 0], sizes = [8, 128], strides = [1, 1]} : vector<8x512xf32> to vector<8x128xf32>
    %43 = arith.negf %42 : vector<8x128xf32>
    %44 = math.exp %43 : vector<8x128xf32>
    %cst_21 = arith.constant 1.000000e+00 : f32
    %45 = vector.broadcast %cst_21 : f32 to vector<8x128xf32>
    %46 = arith.addf %45, %44 : vector<8x128xf32>
    %47 = arith.divf %45, %46 : vector<8x128xf32>
    %48 = vector.extract_strided_slice %41 {offsets = [0, 128], sizes = [8, 128], strides = [1, 1]} : vector<8x512xf32> to vector<8x128xf32>
    %49 = arith.negf %48 : vector<8x128xf32>
    %50 = math.exp %49 : vector<8x128xf32>
    %cst_22 = arith.constant 1.000000e+00 : f32
    %51 = vector.broadcast %cst_22 : f32 to vector<8x128xf32>
    %52 = arith.addf %51, %50 : vector<8x128xf32>
    %53 = arith.divf %51, %52 : vector<8x128xf32>
    %54 = vector.extract_strided_slice %41 {offsets = [0, 256], sizes = [8, 128], strides = [1, 1]} : vector<8x512xf32> to vector<8x128xf32>
    %55 = math.tanh %54 : vector<8x128xf32>
    %56 = vector.extract_strided_slice %41 {offsets = [0, 384], sizes = [8, 128], strides = [1, 1]} : vector<8x512xf32> to vector<8x128xf32>
    %57 = arith.negf %56 : vector<8x128xf32>
    %58 = math.exp %57 : vector<8x128xf32>
    %cst_23 = arith.constant 1.000000e+00 : f32
    %59 = vector.broadcast %cst_23 : f32 to vector<8x128xf32>
    %60 = arith.addf %59, %58 : vector<8x128xf32>
    %61 = arith.divf %59, %60 : vector<8x128xf32>
    %62 = arith.mulf %53, %35 : vector<8x128xf32>
    %63 = arith.mulf %47, %55 : vector<8x128xf32>
    %64 = arith.addf %62, %63 : vector<8x128xf32>
    %65 = math.tanh %64 : vector<8x128xf32>
    %66 = arith.mulf %61, %65 : vector<8x128xf32>
    %c16 = arith.constant 16 : index
    %c0_24 = arith.constant 0 : index
    %67 = vector.load %arg7[%c16, %c0_24] : memref<64x512xf32, #tpu.memory_space<vmem>>, vector<8x512xf32>
    %c0_25 = arith.constant 0 : index
    %c0_26 = arith.constant 0 : index
    %68 = vector.load %arg2[%c0_25, %c0_26] : memref<128x512xf32, #tpu.memory_space<vmem>>, vector<128x512xf32>
    %cst_27 = arith.constant dense<0.000000e+00> : vector<8x512xf32>
    %69 = tpu.matmul %66, %68, %cst_27 {dimension_numbers = #tpu.dot_dimension_numbers<[1], [0], [0], [1], [0, 0, 1, 1], [], []>} : vector<8x128xf32>, vector<128x512xf32>, vector<8x512xf32> -> vector<8x512xf32>
    %70 = arith.addf %67, %69 : vector<8x512xf32>
    %71 = vector.extract_strided_slice %70 {offsets = [0, 0], sizes = [8, 128], strides = [1, 1]} : vector<8x512xf32> to vector<8x128xf32>
    %72 = arith.negf %71 : vector<8x128xf32>
    %73 = math.exp %72 : vector<8x128xf32>
    %cst_28 = arith.constant 1.000000e+00 : f32
    %74 = vector.broadcast %cst_28 : f32 to vector<8x128xf32>
    %75 = arith.addf %74, %73 : vector<8x128xf32>
    %76 = arith.divf %74, %75 : vector<8x128xf32>
    %77 = vector.extract_strided_slice %70 {offsets = [0, 128], sizes = [8, 128], strides = [1, 1]} : vector<8x512xf32> to vector<8x128xf32>
    %78 = arith.negf %77 : vector<8x128xf32>
    %79 = math.exp %78 : vector<8x128xf32>
    %cst_29 = arith.constant 1.000000e+00 : f32
    %80 = vector.broadcast %cst_29 : f32 to vector<8x128xf32>
    %81 = arith.addf %80, %79 : vector<8x128xf32>
    %82 = arith.divf %80, %81 : vector<8x128xf32>
    %83 = vector.extract_strided_slice %70 {offsets = [0, 256], sizes = [8, 128], strides = [1, 1]} : vector<8x512xf32> to vector<8x128xf32>
    %84 = math.tanh %83 : vector<8x128xf32>
    %85 = vector.extract_strided_slice %70 {offsets = [0, 384], sizes = [8, 128], strides = [1, 1]} : vector<8x512xf32> to vector<8x128xf32>
    %86 = arith.negf %85 : vector<8x128xf32>
    %87 = math.exp %86 : vector<8x128xf32>
    %cst_30 = arith.constant 1.000000e+00 : f32
    %88 = vector.broadcast %cst_30 : f32 to vector<8x128xf32>
    %89 = arith.addf %88, %87 : vector<8x128xf32>
    %90 = arith.divf %88, %89 : vector<8x128xf32>
    %91 = arith.mulf %82, %64 : vector<8x128xf32>
    %92 = arith.mulf %76, %84 : vector<8x128xf32>
    %93 = arith.addf %91, %92 : vector<8x128xf32>
    %94 = math.tanh %93 : vector<8x128xf32>
    %95 = arith.mulf %90, %94 : vector<8x128xf32>
    %c24 = arith.constant 24 : index
    %c0_31 = arith.constant 0 : index
    %96 = vector.load %arg7[%c24, %c0_31] : memref<64x512xf32, #tpu.memory_space<vmem>>, vector<8x512xf32>
    %c0_32 = arith.constant 0 : index
    %c0_33 = arith.constant 0 : index
    %97 = vector.load %arg2[%c0_32, %c0_33] : memref<128x512xf32, #tpu.memory_space<vmem>>, vector<128x512xf32>
    %cst_34 = arith.constant dense<0.000000e+00> : vector<8x512xf32>
    %98 = tpu.matmul %95, %97, %cst_34 {dimension_numbers = #tpu.dot_dimension_numbers<[1], [0], [0], [1], [0, 0, 1, 1], [], []>} : vector<8x128xf32>, vector<128x512xf32>, vector<8x512xf32> -> vector<8x512xf32>
    %99 = arith.addf %96, %98 : vector<8x512xf32>
    %100 = vector.extract_strided_slice %99 {offsets = [0, 0], sizes = [8, 128], strides = [1, 1]} : vector<8x512xf32> to vector<8x128xf32>
    %101 = arith.negf %100 : vector<8x128xf32>
    %102 = math.exp %101 : vector<8x128xf32>
    %cst_35 = arith.constant 1.000000e+00 : f32
    %103 = vector.broadcast %cst_35 : f32 to vector<8x128xf32>
    %104 = arith.addf %103, %102 : vector<8x128xf32>
    %105 = arith.divf %103, %104 : vector<8x128xf32>
    %106 = vector.extract_strided_slice %99 {offsets = [0, 128], sizes = [8, 128], strides = [1, 1]} : vector<8x512xf32> to vector<8x128xf32>
    %107 = arith.negf %106 : vector<8x128xf32>
    %108 = math.exp %107 : vector<8x128xf32>
    %cst_36 = arith.constant 1.000000e+00 : f32
    %109 = vector.broadcast %cst_36 : f32 to vector<8x128xf32>
    %110 = arith.addf %109, %108 : vector<8x128xf32>
    %111 = arith.divf %109, %110 : vector<8x128xf32>
    %112 = vector.extract_strided_slice %99 {offsets = [0, 256], sizes = [8, 128], strides = [1, 1]} : vector<8x512xf32> to vector<8x128xf32>
    %113 = math.tanh %112 : vector<8x128xf32>
    %114 = vector.extract_strided_slice %99 {offsets = [0, 384], sizes = [8, 128], strides = [1, 1]} : vector<8x512xf32> to vector<8x128xf32>
    %115 = arith.negf %114 : vector<8x128xf32>
    %116 = math.exp %115 : vector<8x128xf32>
    %cst_37 = arith.constant 1.000000e+00 : f32
    %117 = vector.broadcast %cst_37 : f32 to vector<8x128xf32>
    %118 = arith.addf %117, %116 : vector<8x128xf32>
    %119 = arith.divf %117, %118 : vector<8x128xf32>
    %120 = arith.mulf %111, %93 : vector<8x128xf32>
    %121 = arith.mulf %105, %113 : vector<8x128xf32>
    %122 = arith.addf %120, %121 : vector<8x128xf32>
    %123 = math.tanh %122 : vector<8x128xf32>
    %124 = arith.mulf %119, %123 : vector<8x128xf32>
    %c32 = arith.constant 32 : index
    %c0_38 = arith.constant 0 : index
    %125 = vector.load %arg7[%c32, %c0_38] : memref<64x512xf32, #tpu.memory_space<vmem>>, vector<8x512xf32>
    %c0_39 = arith.constant 0 : index
    %c0_40 = arith.constant 0 : index
    %126 = vector.load %arg2[%c0_39, %c0_40] : memref<128x512xf32, #tpu.memory_space<vmem>>, vector<128x512xf32>
    %cst_41 = arith.constant dense<0.000000e+00> : vector<8x512xf32>
    %127 = tpu.matmul %124, %126, %cst_41 {dimension_numbers = #tpu.dot_dimension_numbers<[1], [0], [0], [1], [0, 0, 1, 1], [], []>} : vector<8x128xf32>, vector<128x512xf32>, vector<8x512xf32> -> vector<8x512xf32>
    %128 = arith.addf %125, %127 : vector<8x512xf32>
    %129 = vector.extract_strided_slice %128 {offsets = [0, 0], sizes = [8, 128], strides = [1, 1]} : vector<8x512xf32> to vector<8x128xf32>
    %130 = arith.negf %129 : vector<8x128xf32>
    %131 = math.exp %130 : vector<8x128xf32>
    %cst_42 = arith.constant 1.000000e+00 : f32
    %132 = vector.broadcast %cst_42 : f32 to vector<8x128xf32>
    %133 = arith.addf %132, %131 : vector<8x128xf32>
    %134 = arith.divf %132, %133 : vector<8x128xf32>
    %135 = vector.extract_strided_slice %128 {offsets = [0, 128], sizes = [8, 128], strides = [1, 1]} : vector<8x512xf32> to vector<8x128xf32>
    %136 = arith.negf %135 : vector<8x128xf32>
    %137 = math.exp %136 : vector<8x128xf32>
    %cst_43 = arith.constant 1.000000e+00 : f32
    %138 = vector.broadcast %cst_43 : f32 to vector<8x128xf32>
    %139 = arith.addf %138, %137 : vector<8x128xf32>
    %140 = arith.divf %138, %139 : vector<8x128xf32>
    %141 = vector.extract_strided_slice %128 {offsets = [0, 256], sizes = [8, 128], strides = [1, 1]} : vector<8x512xf32> to vector<8x128xf32>
    %142 = math.tanh %141 : vector<8x128xf32>
    %143 = vector.extract_strided_slice %128 {offsets = [0, 384], sizes = [8, 128], strides = [1, 1]} : vector<8x512xf32> to vector<8x128xf32>
    %144 = arith.negf %143 : vector<8x128xf32>
    %145 = math.exp %144 : vector<8x128xf32>
    %cst_44 = arith.constant 1.000000e+00 : f32
    %146 = vector.broadcast %cst_44 : f32 to vector<8x128xf32>
    %147 = arith.addf %146, %145 : vector<8x128xf32>
    %148 = arith.divf %146, %147 : vector<8x128xf32>
    %149 = arith.mulf %140, %122 : vector<8x128xf32>
    %150 = arith.mulf %134, %142 : vector<8x128xf32>
    %151 = arith.addf %149, %150 : vector<8x128xf32>
    %152 = math.tanh %151 : vector<8x128xf32>
    %153 = arith.mulf %148, %152 : vector<8x128xf32>
    %c40 = arith.constant 40 : index
    %c0_45 = arith.constant 0 : index
    %154 = vector.load %arg7[%c40, %c0_45] : memref<64x512xf32, #tpu.memory_space<vmem>>, vector<8x512xf32>
    %c0_46 = arith.constant 0 : index
    %c0_47 = arith.constant 0 : index
    %155 = vector.load %arg2[%c0_46, %c0_47] : memref<128x512xf32, #tpu.memory_space<vmem>>, vector<128x512xf32>
    %cst_48 = arith.constant dense<0.000000e+00> : vector<8x512xf32>
    %156 = tpu.matmul %153, %155, %cst_48 {dimension_numbers = #tpu.dot_dimension_numbers<[1], [0], [0], [1], [0, 0, 1, 1], [], []>} : vector<8x128xf32>, vector<128x512xf32>, vector<8x512xf32> -> vector<8x512xf32>
    %157 = arith.addf %154, %156 : vector<8x512xf32>
    %158 = vector.extract_strided_slice %157 {offsets = [0, 0], sizes = [8, 128], strides = [1, 1]} : vector<8x512xf32> to vector<8x128xf32>
    %159 = arith.negf %158 : vector<8x128xf32>
    %160 = math.exp %159 : vector<8x128xf32>
    %cst_49 = arith.constant 1.000000e+00 : f32
    %161 = vector.broadcast %cst_49 : f32 to vector<8x128xf32>
    %162 = arith.addf %161, %160 : vector<8x128xf32>
    %163 = arith.divf %161, %162 : vector<8x128xf32>
    %164 = vector.extract_strided_slice %157 {offsets = [0, 128], sizes = [8, 128], strides = [1, 1]} : vector<8x512xf32> to vector<8x128xf32>
    %165 = arith.negf %164 : vector<8x128xf32>
    %166 = math.exp %165 : vector<8x128xf32>
    %cst_50 = arith.constant 1.000000e+00 : f32
    %167 = vector.broadcast %cst_50 : f32 to vector<8x128xf32>
    %168 = arith.addf %167, %166 : vector<8x128xf32>
    %169 = arith.divf %167, %168 : vector<8x128xf32>
    %170 = vector.extract_strided_slice %157 {offsets = [0, 256], sizes = [8, 128], strides = [1, 1]} : vector<8x512xf32> to vector<8x128xf32>
    %171 = math.tanh %170 : vector<8x128xf32>
    %172 = vector.extract_strided_slice %157 {offsets = [0, 384], sizes = [8, 128], strides = [1, 1]} : vector<8x512xf32> to vector<8x128xf32>
    %173 = arith.negf %172 : vector<8x128xf32>
    %174 = math.exp %173 : vector<8x128xf32>
    %cst_51 = arith.constant 1.000000e+00 : f32
    %175 = vector.broadcast %cst_51 : f32 to vector<8x128xf32>
    %176 = arith.addf %175, %174 : vector<8x128xf32>
    %177 = arith.divf %175, %176 : vector<8x128xf32>
    %178 = arith.mulf %169, %151 : vector<8x128xf32>
    %179 = arith.mulf %163, %171 : vector<8x128xf32>
    %180 = arith.addf %178, %179 : vector<8x128xf32>
    %181 = math.tanh %180 : vector<8x128xf32>
    %182 = arith.mulf %177, %181 : vector<8x128xf32>
    %c48 = arith.constant 48 : index
    %c0_52 = arith.constant 0 : index
    %183 = vector.load %arg7[%c48, %c0_52] : memref<64x512xf32, #tpu.memory_space<vmem>>, vector<8x512xf32>
    %c0_53 = arith.constant 0 : index
    %c0_54 = arith.constant 0 : index
    %184 = vector.load %arg2[%c0_53, %c0_54] : memref<128x512xf32, #tpu.memory_space<vmem>>, vector<128x512xf32>
    %cst_55 = arith.constant dense<0.000000e+00> : vector<8x512xf32>
    %185 = tpu.matmul %182, %184, %cst_55 {dimension_numbers = #tpu.dot_dimension_numbers<[1], [0], [0], [1], [0, 0, 1, 1], [], []>} : vector<8x128xf32>, vector<128x512xf32>, vector<8x512xf32> -> vector<8x512xf32>
    %186 = arith.addf %183, %185 : vector<8x512xf32>
    %187 = vector.extract_strided_slice %186 {offsets = [0, 0], sizes = [8, 128], strides = [1, 1]} : vector<8x512xf32> to vector<8x128xf32>
    %188 = arith.negf %187 : vector<8x128xf32>
    %189 = math.exp %188 : vector<8x128xf32>
    %cst_56 = arith.constant 1.000000e+00 : f32
    %190 = vector.broadcast %cst_56 : f32 to vector<8x128xf32>
    %191 = arith.addf %190, %189 : vector<8x128xf32>
    %192 = arith.divf %190, %191 : vector<8x128xf32>
    %193 = vector.extract_strided_slice %186 {offsets = [0, 128], sizes = [8, 128], strides = [1, 1]} : vector<8x512xf32> to vector<8x128xf32>
    %194 = arith.negf %193 : vector<8x128xf32>
    %195 = math.exp %194 : vector<8x128xf32>
    %cst_57 = arith.constant 1.000000e+00 : f32
    %196 = vector.broadcast %cst_57 : f32 to vector<8x128xf32>
    %197 = arith.addf %196, %195 : vector<8x128xf32>
    %198 = arith.divf %196, %197 : vector<8x128xf32>
    %199 = vector.extract_strided_slice %186 {offsets = [0, 256], sizes = [8, 128], strides = [1, 1]} : vector<8x512xf32> to vector<8x128xf32>
    %200 = math.tanh %199 : vector<8x128xf32>
    %201 = vector.extract_strided_slice %186 {offsets = [0, 384], sizes = [8, 128], strides = [1, 1]} : vector<8x512xf32> to vector<8x128xf32>
    %202 = arith.negf %201 : vector<8x128xf32>
    %203 = math.exp %202 : vector<8x128xf32>
    %cst_58 = arith.constant 1.000000e+00 : f32
    %204 = vector.broadcast %cst_58 : f32 to vector<8x128xf32>
    %205 = arith.addf %204, %203 : vector<8x128xf32>
    %206 = arith.divf %204, %205 : vector<8x128xf32>
    %207 = arith.mulf %198, %180 : vector<8x128xf32>
    %208 = arith.mulf %192, %200 : vector<8x128xf32>
    %209 = arith.addf %207, %208 : vector<8x128xf32>
    %210 = math.tanh %209 : vector<8x128xf32>
    %211 = arith.mulf %206, %210 : vector<8x128xf32>
    %c56 = arith.constant 56 : index
    %c0_59 = arith.constant 0 : index
    %212 = vector.load %arg7[%c56, %c0_59] : memref<64x512xf32, #tpu.memory_space<vmem>>, vector<8x512xf32>
    %c0_60 = arith.constant 0 : index
    %c0_61 = arith.constant 0 : index
    %213 = vector.load %arg2[%c0_60, %c0_61] : memref<128x512xf32, #tpu.memory_space<vmem>>, vector<128x512xf32>
    %cst_62 = arith.constant dense<0.000000e+00> : vector<8x512xf32>
    %214 = tpu.matmul %211, %213, %cst_62 {dimension_numbers = #tpu.dot_dimension_numbers<[1], [0], [0], [1], [0, 0, 1, 1], [], []>} : vector<8x128xf32>, vector<128x512xf32>, vector<8x512xf32> -> vector<8x512xf32>
    %215 = arith.addf %212, %214 : vector<8x512xf32>
    %216 = vector.extract_strided_slice %215 {offsets = [0, 0], sizes = [8, 128], strides = [1, 1]} : vector<8x512xf32> to vector<8x128xf32>
    %217 = arith.negf %216 : vector<8x128xf32>
    %218 = math.exp %217 : vector<8x128xf32>
    %cst_63 = arith.constant 1.000000e+00 : f32
    %219 = vector.broadcast %cst_63 : f32 to vector<8x128xf32>
    %220 = arith.addf %219, %218 : vector<8x128xf32>
    %221 = arith.divf %219, %220 : vector<8x128xf32>
    %222 = vector.extract_strided_slice %215 {offsets = [0, 128], sizes = [8, 128], strides = [1, 1]} : vector<8x512xf32> to vector<8x128xf32>
    %223 = arith.negf %222 : vector<8x128xf32>
    %224 = math.exp %223 : vector<8x128xf32>
    %cst_64 = arith.constant 1.000000e+00 : f32
    %225 = vector.broadcast %cst_64 : f32 to vector<8x128xf32>
    %226 = arith.addf %225, %224 : vector<8x128xf32>
    %227 = arith.divf %225, %226 : vector<8x128xf32>
    %228 = vector.extract_strided_slice %215 {offsets = [0, 256], sizes = [8, 128], strides = [1, 1]} : vector<8x512xf32> to vector<8x128xf32>
    %229 = math.tanh %228 : vector<8x128xf32>
    %230 = vector.extract_strided_slice %215 {offsets = [0, 384], sizes = [8, 128], strides = [1, 1]} : vector<8x512xf32> to vector<8x128xf32>
    %231 = arith.negf %230 : vector<8x128xf32>
    %232 = math.exp %231 : vector<8x128xf32>
    %cst_65 = arith.constant 1.000000e+00 : f32
    %233 = vector.broadcast %cst_65 : f32 to vector<8x128xf32>
    %234 = arith.addf %233, %232 : vector<8x128xf32>
    %235 = arith.divf %233, %234 : vector<8x128xf32>
    %236 = arith.mulf %227, %209 : vector<8x128xf32>
    %237 = arith.mulf %221, %229 : vector<8x128xf32>
    %238 = arith.addf %236, %237 : vector<8x128xf32>
    %239 = math.tanh %238 : vector<8x128xf32>
    %240 = arith.mulf %235, %239 : vector<8x128xf32>
    %cst_66 = arith.constant 0.000000e+00 : f32
    %241 = vector.broadcast %cst_66 : f32 to vector<8x128xf32>
    %242 = arith.maximumf %240, %241 : vector<8x128xf32>
    %c0_67 = arith.constant 0 : index
    %c0_68 = arith.constant 0 : index
    %243 = vector.load %arg4[%c0_67, %c0_68] : memref<128x128xf32, #tpu.memory_space<vmem>>, vector<128x128xf32>
    %cst_69 = arith.constant dense<0.000000e+00> : vector<8x128xf32>
    %244 = tpu.matmul %242, %243, %cst_69 {dimension_numbers = #tpu.dot_dimension_numbers<[1], [0], [0], [1], [0, 0, 1, 1], [], []>} : vector<8x128xf32>, vector<128x128xf32>, vector<8x128xf32> -> vector<8x128xf32>
    %c0_70 = arith.constant 0 : index
    %c0_71 = arith.constant 0 : index
    %245 = vector.load %arg5[%c0_70, %c0_71] : memref<1x128xf32, #tpu.memory_space<vmem>>, vector<1x128xf32>
    %246 = vector.broadcast %245 : vector<1x128xf32> to vector<8x128xf32>
    %247 = arith.addf %244, %246 : vector<8x128xf32>
    %c0_72 = arith.constant 0 : index
    %c0_73 = arith.constant 0 : index
    %248 = vector.load %arg6[%c0_72, %c0_73] : memref<8x128xf32, #tpu.memory_space<vmem>>, vector<8x128xf32>
    tpu.vector_store %arg6[%c0_72, %c0_73], %247 {strides = array<i32>} : memref<8x128xf32, #tpu.memory_space<vmem>>, vector<8x128xf32>,
    return
  }
}

</mosaic_0001>

<llo_original>
// kernel: tpu_custom_call.1
$region0: #{tpu_custom_call.1}
  #allocation0 [shape = 'u32[]', space=smem, size = 0x4, offset = 0x4, fixed_abs, tag = 'smem constant byte address 0x4 - core index']
  #allocation1 [shape = 'u32[144,128]{1,0:T(1,128)}', space=vmem, size = 0x12000, scoped, tag = 'internal scratch']
  #allocation2 [shape = 'f32[64,512]{1,0:T(8,128)}', space=vmem, size = 0x20000, scoped, tag = 'scratch operand']
  %s0 = inlined_call_operand.vmem [shape: f32[64,32], index: 0, kind: input, shape index: {}]
  %s1 = inlined_call_operand.hbm [shape: f32[32,512], index: 1, kind: input, shape index: {}]
  %s2 = inlined_call_operand.hbm [shape: f32[128,512], index: 2, kind: input, shape index: {}]
  %s3 = inlined_call_operand.vmem [shape: f32[1,512], index: 3, kind: input, shape index: {}]
  %s4 = inlined_call_operand.hbm [shape: f32[128,128], index: 4, kind: input, shape index: {}]
  %s5 = inlined_call_operand.vmem [shape: f32[1,128], index: 5, kind: input, shape index: {}]
  %s6 = inlined_call_operand.hbm [shape: f32[8,128], index: 6, kind: output, shape index: {}]
  %s7 = sld [smem:[#allocation0]]
  $region46: #{tpu_custom_call.1} parent=0
    _
  %s9 = ssub.s32 1, %s7
  %s10 = scalar_select 0, %s9, %s7
  $region1: #{tpu_custom_call.1} parent=0
    #allocation3 [shape = 'u8[65536]{0}', space=vmem, size = 0x10000, scoped, tag = 'input window, operand 1, single buffered']
    #allocation4 [shape = 's32[1]{0}', space=sflag, size = 0x4, scoped, tag = 'scoped memory for tpu_custom_call.1']
    #allocation5 [shape = 's32[1]{0}', space=sflag, size = 0x4, scoped, tag = 'scoped memory for tpu_custom_call.1']
    #allocation6 [shape = 'u8[262144]{0}', space=vmem, size = 0x40000, scoped, tag = 'input window, operand 2, single buffered']
    #allocation7 [shape = 's32[1]{0}', space=sflag, size = 0x4, scoped, tag = 'scoped memory for tpu_custom_call.1']
    #allocation8 [shape = 'u8[65536]{0}', space=vmem, size = 0x10000, scoped, tag = 'input window, operand 4, single buffered']
    #allocation9 [shape = 'u8[4096]{0}', space=vmem, size = 0x1000, scoped, tag = 'output window, operand 0, single buffered']
    %11 = vsyncpa [#allocation4], 0
    %12 = vsyncpa [#allocation7], 0
    %13 = vsyncpa [#allocation5], 0
    // Predicated region
    $region2: #{tpu_custom_call.1} parent=1 // pred_check
      _
    $region3: #{tpu_custom_call.1} parent=1 // pred_check_branch
      %15 = sbr.rel (0) target = $region5
    $region4: #{tpu_custom_call.1} parent=1 // pred_region
      _
    $region5: #{tpu_custom_call.1} parent=1 // pred_fallthru
      _
    // Predicated region
    $region6: #{tpu_custom_call.1} parent=1 // pred_check
      _
    $region7: #{tpu_custom_call.1} parent=1 // pred_check_branch
      %17 = sbr.rel (0) target = $region9
    $region8: #{tpu_custom_call.1} parent=1 // pred_region
      %s19 = ssub.s32 2048, 2048
      %20 = vsyncadd [#allocation4], %s19
      %s21 = sshll.u32 [#allocation3], 4
      %s22 = int_to_ptr.vmem [resolvable:$true] %s21
      %27 = dma.hbm_to_vmem [thread:$0]  %s1, 2048, %s22, [#allocation4], 512, 512, 32
    $region9: #{tpu_custom_call.1} parent=1 // pred_fallthru
      _
    // Predicated region
    $region10: #{tpu_custom_call.1} parent=1 // pred_check
      _
    $region11: #{tpu_custom_call.1} parent=1 // pred_check_branch
      %29 = sbr.rel (0) target = $region13
    $region12: #{tpu_custom_call.1} parent=1 // pred_region
      %s31 = ssub.s32 8192, 8192
      %32 = vsyncadd [#allocation7], %s31
      %s33 = sshll.u32 [#allocation6], 4
      %s34 = int_to_ptr.vmem [resolvable:$true] %s33
      %39 = dma.hbm_to_vmem [thread:$0]  %s2, 8192, %s34, [#allocation7], 512, 512, 32
    $region13: #{tpu_custom_call.1} parent=1 // pred_fallthru
      _
    // Predicated region
    $region14: #{tpu_custom_call.1} parent=1 // pred_check
      _
    $region15: #{tpu_custom_call.1} parent=1 // pred_check_branch
      %41 = sbr.rel (0) target = $region17
    $region16: #{tpu_custom_call.1} parent=1 // pred_region
      _
    $region17: #{tpu_custom_call.1} parent=1 // pred_fallthru
      _
    // Predicated region
    $region18: #{tpu_custom_call.1} parent=1 // pred_check
      _
    $region19: #{tpu_custom_call.1} parent=1 // pred_check_branch
      %43 = sbr.rel (0) target = $region21
    $region20: #{tpu_custom_call.1} parent=1 // pred_region
      %s45 = ssub.s32 2048, 2048
      %46 = vsyncadd [#allocation7], %s45
      %s47 = sshll.u32 [#allocation8], 4
      %s48 = int_to_ptr.vmem [resolvable:$true] %s47
      %53 = dma.hbm_to_vmem [thread:$0]  %s4, 2048, %s48, [#allocation7], 128, 128, 8
    $region21: #{tpu_custom_call.1} parent=1 // pred_fallthru
      _
    // Predicated region
    $region22: #{tpu_custom_call.1} parent=1 // pred_check
      _
    $region23: #{tpu_custom_call.1} parent=1 // pred_check_branch
      %55 = sbr.rel (0) target = $region25
    $region24: #{tpu_custom_call.1} parent=1 // pred_region
      _
    $region25: #{tpu_custom_call.1} parent=1 // pred_fallthru
      _
    // Predicated region
    $region26: #{tpu_custom_call.1} parent=1 // pred_check
      _
    $region27: #{tpu_custom_call.1} parent=1 // pred_check_branch
      %57 = sbr.rel (0) target = $region29
    $region28: #{tpu_custom_call.1} parent=1 // pred_region
      %58 = dma.done [#allocation4], 2048
    $region29: #{tpu_custom_call.1} parent=1 // pred_fallthru
      _
    // Predicated region
    $region30: #{tpu_custom_call.1} parent=1 // pred_check
      _
    $region31: #{tpu_custom_call.1} parent=1 // pred_check_branch
      %60 = sbr.rel (0) target = $region33
    $region32: #{tpu_custom_call.1} parent=1 // pred_region
      %61 = dma.done [#allocation7], 8192
    $region33: #{tpu_custom_call.1} parent=1 // pred_fallthru
      _
    // Predicated region
    $region34: #{tpu_custom_call.1} parent=1 // pred_check
      _
    $region35: #{tpu_custom_call.1} parent=1 // pred_check_branch
      %63 = sbr.rel (0) target = $region37
    $region36: #{tpu_custom_call.1} parent=1 // pred_region
      %64 = dma.done [#allocation7], 2048
    $region37: #{tpu_custom_call.1} parent=1 // pred_fallthru
      _
    %v65 = vld [vmem:[%s0] sm:$0xff]
    %v66 = vld [vmem:[%s0 + $0x8] sm:$0xff]
    %v67 = vld [vmem:[%s0 + $0x10] sm:$0xff]
    %v68 = vld [vmem:[%s0 + $0x18] sm:$0xff]
    %v69 = vld [vmem:[%s0 + $0x20] sm:$0xff]
    %v70 = vld [vmem:[%s0 + $0x28] sm:$0xff]
    %v71 = vld [vmem:[%s0 + $0x30] sm:$0xff]
    %v72 = vld [vmem:[%s0 + $0x38] sm:$0xff]
    %v73 = vld [vmem:[#allocation3] sm:$0xff]
    %v74 = vld [vmem:[#allocation3 + $0x8] sm:$0xff]
    %v75 = vld [vmem:[#allocation3 + $0x10] sm:$0xff]
    %v76 = vld [vmem:[#allocation3 + $0x18] sm:$0xff]
    %v77 = vld [vmem:[#allocation3 + $0x20] sm:$0xff]
    %v78 = vld [vmem:[#allocation3 + $0x28] sm:$0xff]
    %v79 = vld [vmem:[#allocation3 + $0x30] sm:$0xff]
    %v80 = vld [vmem:[#allocation3 + $0x38] sm:$0xff]
    %v81 = vld [vmem:[#allocation3 + $0x40] sm:$0xff]
    %v82 = vld [vmem:[#allocation3 + $0x48] sm:$0xff]
    %v83 = vld [vmem:[#allocation3 + $0x50] sm:$0xff]
    %v84 = vld [vmem:[#allocation3 + $0x58] sm:$0xff]
    %v85 = vld [vmem:[#allocation3 + $0x60] sm:$0xff]
    %v86 = vld [vmem:[#allocation3 + $0x68] sm:$0xff]
    %v87 = vld [vmem:[#allocation3 + $0x70] sm:$0xff]
    %v88 = vld [vmem:[#allocation3 + $0x78] sm:$0xff]
    %v89 = vld [vmem:[%s3] sm:$0xf]
    %v91 = vlaneseq
    %v92 = vshrl.u32 %v91, 7
    %v93 = vsub.s32 0, %v92
    %v94 = vrot.slane %v89, %v93
    %v95 = vlaneseq
    %v96 = vshrl.u32 %v95, 7
    %v97 = vsub.s32 1, %v96
    %v98 = vrot.slane %v89, %v97
    %v99 = vlaneseq
    %v100 = vshrl.u32 %v99, 7
    %v101 = vsub.s32 2, %v100
    %v102 = vrot.slane %v89, %v101
    %v103 = vlaneseq
    %v104 = vshrl.u32 %v103, 7
    %v105 = vsub.s32 3, %v104
    %v106 = vrot.slane %v89, %v105
    %vm111 = vcmask 261120
    %v113 = vsel %vm111, %v65, 0
    %v116 = vsel %vm111, %v66, 0
    %v119 = vsel %vm111, %v67, 0
    %v122 = vsel %vm111, %v68, 0
    %v125 = vsel %vm111, %v69, 0
    %v128 = vsel %vm111, %v70, 0
    %v131 = vsel %vm111, %v71, 0
    %v134 = vsel %vm111, %v72, 0
    %136 = vmatprep.subr.mxu0 %v74
    %137 = vmatpush1.msra.mxu0 %v73
    %138 = vmatprep.subr.mxu0 %v78
    %139 = vmatpush1.msra.mxu0 %v77
    %140 = vmatprep.subr.mxu0 %v82
    %141 = vmatpush1.msra.mxu0 %v81
    %142 = vmatprep.subr.mxu0 %v86
    %143 = vmatpush1.msra.mxu0 %v85
    %144 = vmatprep.subr.mxu0 0.0
    %145 = vmatpush1.msra.mxu0 0.0
    %146 = vmatprep.subr.mxu0 0.0
    %147 = vmatpush1.msra.mxu0 0.0
    %148 = vmatprep.subr.mxu0 0.0
    %149 = vmatpush1.msra.mxu0 0.0
    %150 = vmatprep.subr.mxu0 0.0
    %151 = vmatpush1.msra.mxu0 0.0
    %152 = vmatprep.subr.mxu0 0.0
    %153 = vmatpush1.msra.mxu0 0.0
    %154 = vmatprep.subr.mxu0 0.0
    %155 = vmatpush1.msra.mxu0 0.0
    %156 = vmatprep.subr.mxu0 0.0
    %157 = vmatpush1.msra.mxu0 0.0
    %158 = vmatprep.subr.mxu0 0.0
    %159 = vmatpush1.msra.mxu0 0.0
    %160 = vmatprep.subr.mxu0 0.0
    %161 = vmatpush1.msra.mxu0 0.0
    %162 = vmatprep.subr.mxu0 0.0
    %163 = vmatpush1.msra.mxu0 0.0
    %164 = vmatprep.subr.mxu0 0.0
    %165 = vmatpush1.msra.mxu0 0.0
    %166 = vmatprep.subr.mxu0 0.0
    %167 = vmatpush1.msra.mxu0 0.0
    %168 = vmatprep.subr.mxu0 0.0
    %169 = vmatpush1.msra.mxu0 0.0
    %170 = vmatprep.subr.mxu0 0.0
    %171 = vmatpush1.msra.mxu0 0.0
    %172 = vmatprep.subr.mxu0 0.0
    %173 = vmatpush1.msra.mxu0 0.0
    %174 = vmatprep.subr.mxu0 0.0
    %175 = vmatpush1.msra.mxu0 0.0
    %176 = vmatprep.subr.mxu0 0.0
    %177 = vmatpush1.msra.mxu0 0.0
    %178 = vmatprep.subr.mxu0 0.0
    %179 = vmatpush1.msra.mxu0 0.0
    %180 = vmatprep.subr.mxu0 0.0
    %181 = vmatpush1.msra.mxu0 0.0
    %182 = vmatprep.subr.mxu0 0.0
    %183 = vmatpush1.msra.mxu0 0.0
    %184 = vmatprep.subr.mxu0 0.0
    %185 = vmatpush1.msra.mxu0 0.0
    %186 = vmatprep.subr.mxu0 0.0
    %187 = vmatpush1.msra.mxu0 0.0
    %188 = vmatprep.subr.mxu0 0.0
    %189 = vmatpush1.msra.mxu0 0.0
    %190 = vmatprep.subr.mxu0 0.0
    %191 = vmatpush1.msra.mxu0 0.0
    %192 = vmatprep.subr.mxu0 0.0
    %193 = vmatpush1.msra.mxu0 0.0
    %194 = vmatprep.subr.mxu0 0.0
    %195 = vmatpush1.msra.mxu0 0.0
    %196 = vmatprep.subr.mxu0 0.0
    %197 = vmatpush1.msra.mxu0 0.0
    %198 = vmatprep.subr.mxu0 0.0
    %199 = vmatpush1.msra.mxu0 0.0
    %200 = vmatprep.mubr.f32.mxu0 0.0
    %201 = vmatmul.mubr.f32.gmra.mrb[0].mxu0 %v113
    %v202 = vpop.f32.mrb[0].mxu0
    %v203 = vadd.f32 %v94, %v202
    %v204 = vpop.f32.mrb[0].mxu0
    %v205 = vadd.f32 %v98, %v204
    %206 = vmatprep.mubr.f32.mxu0 0.0
    %207 = vmatmul.mubr.f32.gmra.mrb[0].mxu0 %v116
    %v208 = vpop.f32.mrb[0].mxu0
    %v209 = vadd.f32 %v94, %v208
    %v210 = vpop.f32.mrb[0].mxu0
    %v211 = vadd.f32 %v98, %v210
    %212 = vmatprep.mubr.f32.mxu0 0.0
    %213 = vmatmul.mubr.f32.gmra.mrb[0].mxu0 %v119
    %v214 = vpop.f32.mrb[0].mxu0
    %v215 = vadd.f32 %v94, %v214
    %v216 = vpop.f32.mrb[0].mxu0
    %v217 = vadd.f32 %v98, %v216
    %218 = vmatprep.mubr.f32.mxu0 0.0
    %219 = vmatmul.mubr.f32.gmra.mrb[0].mxu0 %v122
    %v220 = vpop.f32.mrb[0].mxu0
    %v221 = vadd.f32 %v94, %v220
    %v222 = vpop.f32.mrb[0].mxu0
    %v223 = vadd.f32 %v98, %v222
    %224 = vmatprep.mubr.f32.mxu0 0.0
    %225 = vmatmul.mubr.f32.gmra.mrb[0].mxu0 %v125
    %v226 = vpop.f32.mrb[0].mxu0
    %v227 = vadd.f32 %v94, %v226
    %v228 = vpop.f32.mrb[0].mxu0
    %v229 = vadd.f32 %v98, %v228
    %230 = vmatprep.mubr.f32.mxu0 0.0
    %231 = vmatmul.mubr.f32.gmra.mrb[0].mxu0 %v128
    %v232 = vpop.f32.mrb[0].mxu0
    %v233 = vadd.f32 %v94, %v232
    %v234 = vpop.f32.mrb[0].mxu0
    %v235 = vadd.f32 %v98, %v234
    %236 = vmatprep.mubr.f32.mxu0 0.0
    %237 = vmatmul.mubr.f32.gmra.mrb[0].mxu0 %v131
    %v238 = vpop.f32.mrb[0].mxu0
    %v239 = vadd.f32 %v94, %v238
    %v240 = vpop.f32.mrb[0].mxu0
    %v241 = vadd.f32 %v98, %v240
    %242 = vmatprep.mubr.f32.mxu0 0.0
    %243 = vmatmul.mubr.f32.gmra.mrb[0].mxu0 %v134
    %v244 = vpop.f32.mrb[0].mxu0
    %v245 = vadd.f32 %v94, %v244
    %v246 = vpop.f32.mrb[0].mxu0
    %v247 = vadd.f32 %v98, %v246
    %248 = vdwg.mxu0
    %249 = vmatprep.subr.mxu0 %v76
    %250 = vmatpush1.msra.mxu0 %v75
    %251 = vmatprep.subr.mxu0 %v80
    %252 = vmatpush1.msra.mxu0 %v79
    %253 = vmatprep.subr.mxu0 %v84
    %254 = vmatpush1.msra.mxu0 %v83
    %255 = vmatprep.subr.mxu0 %v88
    %256 = vmatpush1.msra.mxu0 %v87
    %257 = vmatprep.subr.mxu0 0.0
    %258 = vmatpush1.msra.mxu0 0.0
    %259 = vmatprep.subr.mxu0 0.0
    %260 = vmatpush1.msra.mxu0 0.0
    %261 = vmatprep.subr.mxu0 0.0
    %262 = vmatpush1.msra.mxu0 0.0
    %263 = vmatprep.subr.mxu0 0.0
    %264 = vmatpush1.msra.mxu0 0.0
    %265 = vmatprep.subr.mxu0 0.0
    %266 = vmatpush1.msra.mxu0 0.0
    %267 = vmatprep.subr.mxu0 0.0
    %268 = vmatpush1.msra.mxu0 0.0
    %269 = vmatprep.subr.mxu0 0.0
    %270 = vmatpush1.msra.mxu0 0.0
    %271 = vmatprep.subr.mxu0 0.0
    %272 = vmatpush1.msra.mxu0 0.0
    %273 = vmatprep.subr.mxu0 0.0
    %274 = vmatpush1.msra.mxu0 0.0
    %275 = vmatprep.subr.mxu0 0.0
    %276 = vmatpush1.msra.mxu0 0.0
    %277 = vmatprep.subr.mxu0 0.0
    %278 = vmatpush1.msra.mxu0 0.0
    %279 = vmatprep.subr.mxu0 0.0
    %280 = vmatpush1.msra.mxu0 0.0
    %281 = vmatprep.subr.mxu0 0.0
    %282 = vmatpush1.msra.mxu0 0.0
    %283 = vmatprep.subr.mxu0 0.0
    %284 = vmatpush1.msra.mxu0 0.0
    %285 = vmatprep.subr.mxu0 0.0
    %286 = vmatpush1.msra.mxu0 0.0
    %287 = vmatprep.subr.mxu0 0.0
    %288 = vmatpush1.msra.mxu0 0.0
    %289 = vmatprep.subr.mxu0 0.0
    %290 = vmatpush1.msra.mxu0 0.0
    %291 = vmatprep.subr.mxu0 0.0
    %292 = vmatpush1.msra.mxu0 0.0
    %293 = vmatprep.subr.mxu0 0.0
    %294 = vmatpush1.msra.mxu0 0.0
    %295 = vmatprep.subr.mxu0 0.0
    %296 = vmatpush1.msra.mxu0 0.0
    %297 = vmatprep.subr.mxu0 0.0
    %298 = vmatpush1.msra.mxu0 0.0
    %299 = vmatprep.subr.mxu0 0.0
    %300 = vmatpush1.msra.mxu0 0.0
    %301 = vmatprep.subr.mxu0 0.0
    %302 = vmatpush1.msra.mxu0 0.0
    %303 = vmatprep.subr.mxu0 0.0
    %304 = vmatpush1.msra.mxu0 0.0
    %305 = vmatprep.subr.mxu0 0.0
    %306 = vmatpush1.msra.mxu0 0.0
    %307 = vmatprep.subr.mxu0 0.0
    %308 = vmatpush1.msra.mxu0 0.0
    %309 = vmatprep.subr.mxu0 0.0
    %310 = vmatpush1.msra.mxu0 0.0
    %311 = vmatprep.subr.mxu0 0.0
    %312 = vmatpush1.msra.mxu0 0.0
    %313 = vmatprep.mubr.f32.mxu0 0.0
    %314 = vmatmul.mubr.f32.gmra.mrb[0].mxu0 %v113
    %v315 = vpop.f32.mrb[0].mxu0
    %v316 = vadd.f32 %v102, %v315
    %v317 = vpop.f32.mrb[0].mxu0
    %v318 = vadd.f32 %v106, %v317
    %319 = vmatprep.mubr.f32.mxu0 0.0
    %320 = vmatmul.mubr.f32.gmra.mrb[0].mxu0 %v116
    %v321 = vpop.f32.mrb[0].mxu0
    %v322 = vadd.f32 %v102, %v321
    %v323 = vpop.f32.mrb[0].mxu0
    %v324 = vadd.f32 %v106, %v323
    %325 = vmatprep.mubr.f32.mxu0 0.0
    %326 = vmatmul.mubr.f32.gmra.mrb[0].mxu0 %v119
    %v327 = vpop.f32.mrb[0].mxu0
    %v328 = vadd.f32 %v102, %v327
    %v329 = vpop.f32.mrb[0].mxu0
    %v330 = vadd.f32 %v106, %v329
    %331 = vmatprep.mubr.f32.mxu0 0.0
    %332 = vmatmul.mubr.f32.gmra.mrb[0].mxu0 %v122
    %v333 = vpop.f32.mrb[0].mxu0
    %v334 = vadd.f32 %v102, %v333
    %v335 = vpop.f32.mrb[0].mxu0
    %v336 = vadd.f32 %v106, %v335
    %337 = vmatprep.mubr.f32.mxu0 0.0
    %338 = vmatmul.mubr.f32.gmra.mrb[0].mxu0 %v125
    %v339 = vpop.f32.mrb[0].mxu0
    %v340 = vadd.f32 %v102, %v339
    %v341 = vpop.f32.mrb[0].mxu0
    %v342 = vadd.f32 %v106, %v341
    %343 = vmatprep.mubr.f32.mxu0 0.0
    %344 = vmatmul.mubr.f32.gmra.mrb[0].mxu0 %v128
    %v345 = vpop.f32.mrb[0].mxu0
    %v346 = vadd.f32 %v102, %v345
    %v347 = vpop.f32.mrb[0].mxu0
    %v348 = vadd.f32 %v106, %v347
    %349 = vmatprep.mubr.f32.mxu0 0.0
    %350 = vmatmul.mubr.f32.gmra.mrb[0].mxu0 %v131
    %v351 = vpop.f32.mrb[0].mxu0
    %v352 = vadd.f32 %v102, %v351
    %v353 = vpop.f32.mrb[0].mxu0
    %v354 = vadd.f32 %v106, %v353
    %355 = vmatprep.mubr.f32.mxu0 0.0
    %356 = vmatmul.mubr.f32.gmra.mrb[0].mxu0 %v134
    %v357 = vpop.f32.mrb[0].mxu0
    %v358 = vadd.f32 %v102, %v357
    %v359 = vpop.f32.mrb[0].mxu0
    %v360 = vadd.f32 %v106, %v359
    %361 = vdwg.mxu0
    %362 = vst [vmem:[#allocation2] sm:$0xff] %v203
    %363 = vst [vmem:[#allocation2 + $0x8] sm:$0xff] %v205
    %364 = vst [vmem:[#allocation2 + $0x10] sm:$0xff] %v316
    %365 = vst [vmem:[#allocation2 + $0x18] sm:$0xff] %v318
    %366 = vst [vmem:[#allocation2 + $0x20] sm:$0xff] %v209
    %367 = vst [vmem:[#allocation2 + $0x28] sm:$0xff] %v211
    %368 = vst [vmem:[#allocation2 + $0x30] sm:$0xff] %v322
    %369 = vst [vmem:[#allocation2 + $0x38] sm:$0xff] %v324
    %370 = vst [vmem:[#allocation2 + $0x40] sm:$0xff] %v215
    %371 = vst [vmem:[#allocation2 + $0x48] sm:$0xff] %v217
    %372 = vst [vmem:[#allocation2 + $0x50] sm:$0xff] %v328
    %373 = vst [vmem:[#allocation2 + $0x58] sm:$0xff] %v330
    %374 = vst [vmem:[#allocation2 + $0x60] sm:$0xff] %v221
    %375 = vst [vmem:[#allocation2 + $0x68] sm:$0xff] %v223
    %376 = vst [vmem:[#allocation2 + $0x70] sm:$0xff] %v334
    %377 = vst [vmem:[#allocation2 + $0x78] sm:$0xff] %v336
    %378 = vst [vmem:[#allocation2 + $0x80] sm:$0xff] %v227
    %379 = vst [vmem:[#allocation2 + $0x88] sm:$0xff] %v229
    %380 = vst [vmem:[#allocation2 + $0x90] sm:$0xff] %v340
    %381 = vst [vmem:[#allocation2 + $0x98] sm:$0xff] %v342
    %382 = vst [vmem:[#allocation2 + $0xa0] sm:$0xff] %v233
    %383 = vst [vmem:[#allocation2 + $0xa8] sm:$0xff] %v235
    %384 = vst [vmem:[#allocation2 + $0xb0] sm:$0xff] %v346
    %385 = vst [vmem:[#allocation2 + $0xb8] sm:$0xff] %v348
    %386 = vst [vmem:[#allocation2 + $0xc0] sm:$0xff] %v239
    %387 = vst [vmem:[#allocation2 + $0xc8] sm:$0xff] %v241
    %388 = vst [vmem:[#allocation2 + $0xd0] sm:$0xff] %v352
    %389 = vst [vmem:[#allocation2 + $0xd8] sm:$0xff] %v354
    %390 = vst [vmem:[#allocation2 + $0xe0] sm:$0xff] %v245
    %391 = vst [vmem:[#allocation2 + $0xe8] sm:$0xff] %v247
    %392 = vst [vmem:[#allocation2 + $0xf0] sm:$0xff] %v358
    %393 = vst [vmem:[#allocation2 + $0xf8] sm:$0xff] %v360
    %v394 = vld [vmem:[#allocation2] sm:$0xff]
    %v395 = vld [vmem:[#allocation2 + $0x8] sm:$0xff]
    %v396 = vld [vmem:[#allocation2 + $0x10] sm:$0xff]
    %v397 = vld [vmem:[#allocation2 + $0x18] sm:$0xff]
    %v398 = vld [vmem:[#allocation6] sm:$0xff]
    %v399 = vld [vmem:[#allocation6 + $0x8] sm:$0xff]
    %v400 = vld [vmem:[#allocation6 + $0x10] sm:$0xff]
    %v401 = vld [vmem:[#allocation6 + $0x18] sm:$0xff]
    %v402 = vld [vmem:[#allocation6 + $0x20] sm:$0xff]
    %v403 = vld [vmem:[#allocation6 + $0x28] sm:$0xff]
    %v404 = vld [vmem:[#allocation6 + $0x30] sm:$0xff]
    %v405 = vld [vmem:[#allocation6 + $0x38] sm:$0xff]
    %v406 = vld [vmem:[#allocation6 + $0x40] sm:$0xff]
    %v407 = vld [vmem:[#allocation6 + $0x48] sm:$0xff]
    %v408 = vld [vmem:[#allocation6 + $0x50] sm:$0xff]
    %v409 = vld [vmem:[#allocation6 + $0x58] sm:$0xff]
    %v410 = vld [vmem:[#allocation6 + $0x60] sm:$0xff]
    %v411 = vld [vmem:[#allocation6 + $0x68] sm:$0xff]
    %v412 = vld [vmem:[#allocation6 + $0x70] sm:$0xff]
    %v413 = vld [vmem:[#allocation6 + $0x78] sm:$0xff]
    %v414 = vld [vmem:[#allocation6 + $0x80] sm:$0xff]
    %v415 = vld [vmem:[#allocation6 + $0x88] sm:$0xff]
    %v416 = vld [vmem:[#allocation6 + $0x90] sm:$0xff]
    %v417 = vld [vmem:[#allocation6 + $0x98] sm:$0xff]
    %v418 = vld [vmem:[#allocation6 + $0xa0] sm:$0xff]
    %v419 = vld [vmem:[#allocation6 + $0xa8] sm:$0xff]
    %v420 = vld [vmem:[#allocation6 + $0xb0] sm:$0xff]
    %v421 = vld [vmem:[#allocation6 + $0xb8] sm:$0xff]
    %v422 = vld [vmem:[#allocation6 + $0xc0] sm:$0xff]
    %v423 = vld [vmem:[#allocation6 + $0xc8] sm:$0xff]
    %v424 = vld [vmem:[#allocation6 + $0xd0] sm:$0xff]
    %v425 = vld [vmem:[#allocation6 + $0xd8] sm:$0xff]
    %v426 = vld [vmem:[#allocation6 + $0xe0] sm:$0xff]
    %v427 = vld [vmem:[#allocation6 + $0xe8] sm:$0xff]
    %v428 = vld [vmem:[#allocation6 + $0xf0] sm:$0xff]
    %v429 = vld [vmem:[#allocation6 + $0xf8] sm:$0xff]
    %v430 = vld [vmem:[#allocation6 + $0x100] sm:$0xff]
    %v431 = vld [vmem:[#allocation6 + $0x108] sm:$0xff]
    %v432 = vld [vmem:[#allocation6 + $0x110] sm:$0xff]
    %v433 = vld [vmem:[#allocation6 + $0x118] sm:$0xff]
    %v434 = vld [vmem:[#allocation6 + $0x120] sm:$0xff]
    %v435 = vld [vmem:[#allocation6 + $0x128] sm:$0xff]
    %v436 = vld [vmem:[#allocation6 + $0x130] sm:$0xff]
    %v437 = vld [vmem:[#allocation6 + $0x138] sm:$0xff]
    %v438 = vld [vmem:[#allocation6 + $0x140] sm:$0xff]
    %v439 = vld [vmem:[#allocation6 + $0x148] sm:$0xff]
    %v440 = vld [vmem:[#allocation6 + $0x150] sm:$0xff]
    %v441 = vld [vmem:[#allocation6 + $0x158] sm:$0xff]
    %v442 = vld [vmem:[#allocation6 + $0x160] sm:$0xff]
    %v443 = vld [vmem:[#allocation6 + $0x168] sm:$0xff]
    %v444 = vld [vmem:[#allocation6 + $0x170] sm:$0xff]
    %v445 = vld [vmem:[#allocation6 + $0x178] sm:$0xff]
    %v446 = vld [vmem:[#allocation6 + $0x180] sm:$0xff]
    %v447 = vld [vmem:[#allocation6 + $0x188] sm:$0xff]
    %v448 = vld [vmem:[#allocation6 + $0x190] sm:$0xff]
    %v449 = vld [vmem:[#allocation6 + $0x198] sm:$0xff]
    %v450 = vld [vmem:[#allocation6 + $0x1a0] sm:$0xff]
    %v451 = vld [vmem:[#allocation6 + $0x1a8] sm:$0xff]
    %v452 = vld [vmem:[#allocation6 + $0x1b0] sm:$0xff]
    %v453 = vld [vmem:[#allocation6 + $0x1b8] sm:$0xff]
    %v454 = vld [vmem:[#allocation6 + $0x1c0] sm:$0xff]
    %v455 = vld [vmem:[#allocation6 + $0x1c8] sm:$0xff]
    %v456 = vld [vmem:[#allocation6 + $0x1d0] sm:$0xff]
    %v457 = vld [vmem:[#allocation6 + $0x1d8] sm:$0xff]
    %v458 = vld [vmem:[#allocation6 + $0x1e0] sm:$0xff]
    %v459 = vld [vmem:[#allocation6 + $0x1e8] sm:$0xff]
    %v460 = vld [vmem:[#allocation6 + $0x1f0] sm:$0xff]
    %v461 = vld [vmem:[#allocation6 + $0x1f8] sm:$0xff]
    %462 = vmatprep.subr.mxu0 %v399
    %463 = vmatpush1.msra.mxu0 %v398
    %464 = vmatprep.subr.mxu0 %v403
    %465 = vmatpush1.msra.mxu0 %v402
    %466 = vmatprep.subr.mxu0 %v407
    %467 = vmatpush1.msra.mxu0 %v406
    %468 = vmatprep.subr.mxu0 %v411
    %469 = vmatpush1.msra.mxu0 %v410
    %470 = vmatprep.subr.mxu0 %v415
    %471 = vmatpush1.msra.mxu0 %v414
    %472 = vmatprep.subr.mxu0 %v419
    %473 = vmatpush1.msra.mxu0 %v418
    %474 = vmatprep.subr.mxu0 %v423
    %475 = vmatpush1.msra.mxu0 %v422
    %476 = vmatprep.subr.mxu0 %v427
    %477 = vmatpush1.msra.mxu0 %v426
    %478 = vmatprep.subr.mxu0 %v431
    %479 = vmatpush1.msra.mxu0 %v430
    %480 = vmatprep.subr.mxu0 %v435
    %481 = vmatpush1.msra.mxu0 %v434
    %482 = vmatprep.subr.mxu0 %v439
    %483 = vmatpush1.msra.mxu0 %v438
    %484 = vmatprep.subr.mxu0 %v443
    %485 = vmatpush1.msra.mxu0 %v442
    %486 = vmatprep.subr.mxu0 %v447
    %487 = vmatpush1.msra.mxu0 %v446
    %488 = vmatprep.subr.mxu0 %v451
    %489 = vmatpush1.msra.mxu0 %v450
    %490 = vmatprep.subr.mxu0 %v455
    %491 = vmatpush1.msra.mxu0 %v454
    %492 = vmatprep.subr.mxu0 %v459
    %493 = vmatpush1.msra.mxu0 %v458
    %494 = vmatprep.subr.mxu0 0.0
    %495 = vmatpush1.msra.mxu0 0.0
    %496 = vmatprep.subr.mxu0 0.0
    %497 = vmatpush1.msra.mxu0 0.0
    %498 = vmatprep.subr.mxu0 0.0
    %499 = vmatpush1.msra.mxu0 0.0
    %500 = vmatprep.subr.mxu0 0.0
    %501 = vmatpush1.msra.mxu0 0.0
    %502 = vmatprep.subr.mxu0 0.0
    %503 = vmatpush1.msra.mxu0 0.0
    %504 = vmatprep.subr.mxu0 0.0
    %505 = vmatpush1.msra.mxu0 0.0
    %506 = vmatprep.subr.mxu0 0.0
    %507 = vmatpush1.msra.mxu0 0.0
    %508 = vmatprep.subr.mxu0 0.0
    %509 = vmatpush1.msra.mxu0 0.0
    %510 = vmatprep.subr.mxu0 0.0
    %511 = vmatpush1.msra.mxu0 0.0
    %512 = vmatprep.subr.mxu0 0.0
    %513 = vmatpush1.msra.mxu0 0.0
    %514 = vmatprep.subr.mxu0 0.0
    %515 = vmatpush1.msra.mxu0 0.0
    %516 = vmatprep.subr.mxu0 0.0
    %517 = vmatpush1.msra.mxu0 0.0
    %518 = vmatprep.subr.mxu0 0.0
    %519 = vmatpush1.msra.mxu0 0.0
    %520 = vmatprep.subr.mxu0 0.0
    %521 = vmatpush1.msra.mxu0 0.0
    %522 = vmatprep.subr.mxu0 0.0
    %523 = vmatpush1.msra.mxu0 0.0
    %524 = vmatprep.subr.mxu0 0.0
    %525 = vmatpush1.msra.mxu0 0.0
    %526 = vmatprep.mubr.f32.mxu0 0.0
    %527 = vmatmul.mubr.f32.gmra.mrb[0].mxu0 0.0
    %v528 = vpop.f32.mrb[0].mxu0
    %v529 = vadd.f32 0.0, %v528
    %v530 = vpop.f32.mrb[0].mxu0
    %v531 = vadd.f32 0.0, %v530
    %532 = vdwg.mxu0
    %533 = vmatprep.subr.mxu0 %v401
    %534 = vmatpush1.msra.mxu0 %v400
    %535 = vmatprep.subr.mxu0 %v405
    %536 = vmatpush1.msra.mxu0 %v404
    %537 = vmatprep.subr.mxu0 %v409
    %538 = vmatpush1.msra.mxu0 %v408
    %539 = vmatprep.subr.mxu0 %v413
    %540 = vmatpush1.msra.mxu0 %v412
    %541 = vmatprep.subr.mxu0 %v417
    %542 = vmatpush1.msra.mxu0 %v416
    %543 = vmatprep.subr.mxu0 %v421
    %544 = vmatpush1.msra.mxu0 %v420
    %545 = vmatprep.subr.mxu0 %v425
    %546 = vmatpush1.msra.mxu0 %v424
    %547 = vmatprep.subr.mxu0 %v429
    %548 = vmatpush1.msra.mxu0 %v428
    %549 = vmatprep.subr.mxu0 %v433
    %550 = vmatpush1.msra.mxu0 %v432
    %551 = vmatprep.subr.mxu0 %v437
    %552 = vmatpush1.msra.mxu0 %v436
    %553 = vmatprep.subr.mxu0 %v441
    %554 = vmatpush1.msra.mxu0 %v440
    %555 = vmatprep.subr.mxu0 %v445
    %556 = vmatpush1.msra.mxu0 %v444
    %557 = vmatprep.subr.mxu0 %v449
    %558 = vmatpush1.msra.mxu0 %v448
    %559 = vmatprep.subr.mxu0 %v453
    %560 = vmatpush1.msra.mxu0 %v452
    %561 = vmatprep.subr.mxu0 %v457
    %562 = vmatpush1.msra.mxu0 %v456
    %563 = vmatprep.subr.mxu0 %v461
    %564 = vmatpush1.msra.mxu0 %v460
    %565 = vmatprep.subr.mxu0 0.0
    %566 = vmatpush1.msra.mxu0 0.0
    %567 = vmatprep.subr.mxu0 0.0
    %568 = vmatpush1.msra.mxu0 0.0
    %569 = vmatprep.subr.mxu0 0.0
    %570 = vmatpush1.msra.mxu0 0.0
    %571 = vmatprep.subr.mxu0 0.0
    %572 = vmatpush1.msra.mxu0 0.0
    %573 = vmatprep.subr.mxu0 0.0
    %574 = vmatpush1.msra.mxu0 0.0
    %575 = vmatprep.subr.mxu0 0.0
    %576 = vmatpush1.msra.mxu0 0.0
    %577 = vmatprep.subr.mxu0 0.0
    %578 = vmatpush1.msra.mxu0 0.0
    %579 = vmatprep.subr.mxu0 0.0
    %580 = vmatpush1.msra.mxu0 0.0
    %581 = vmatprep.subr.mxu0 0.0
    %582 = vmatpush1.msra.mxu0 0.0
    %583 = vmatprep.subr.mxu0 0.0
    %584 = vmatpush1.msra.mxu0 0.0
    %585 = vmatprep.subr.mxu0 0.0
    %586 = vmatpush1.msra.mxu0 0.0
    %587 = vmatprep.subr.mxu0 0.0
    %588 = vmatpush1.msra.mxu0 0.0
    %589 = vmatprep.subr.mxu0 0.0
    %590 = vmatpush1.msra.mxu0 0.0
    %591 = vmatprep.subr.mxu0 0.0
    %592 = vmatpush1.msra.mxu0 0.0
    %593 = vmatprep.subr.mxu0 0.0
    %594 = vmatpush1.msra.mxu0 0.0
    %595 = vmatprep.subr.mxu0 0.0
    %596 = vmatpush1.msra.mxu0 0.0
    %597 = vmatprep.mubr.f32.mxu0 0.0
    %598 = vmatmul.mubr.f32.gmra.mrb[0].mxu0 0.0
    %v599 = vpop.f32.mrb[0].mxu0
    %v600 = vadd.f32 0.0, %v599
    %v601 = vpop.f32.mrb[0].mxu0
    %v602 = vadd.f32 0.0, %v601
    %603 = vdwg.mxu0
    %v604 = vadd.f32 %v394, %v529
    %v605 = vadd.f32 %v395, %v531
    %v606 = vadd.f32 %v396, %v600
    %v607 = vadd.f32 %v397, %v602
    %v608 = vxor.u32 %v604, 2147483648
    %v609 = vmul.f32 %v608, 1.442695
    %v610 = vpow.pop %v609
    %v611 = vadd.f32 %v610, 1.0
    %v612 = vrcp.pop %v611
    %v613 = vmul.f32 1.0, %v612
    %v614 = vxor.u32 %v605, 2147483648
    %v615 = vmul.f32 %v614, 1.442695
    %v616 = vpow.pop %v615
    %v617 = vadd.f32 %v616, 1.0
    %v618 = vrcp.pop %v617
    %v619 = vmul.f32 1.0, %v618
    %v620 = vtanh.pop %v606
    %v621 = vxor.u32 %v607, 2147483648
    %v622 = vmul.f32 %v621, 1.442695
    %v623 = vpow.pop %v622
    %v624 = vadd.f32 %v623, 1.0
    %v625 = vrcp.pop %v624
    %v626 = vmul.f32 1.0, %v625
    %v627 = vmul.f32 %v619, 0.0
    %v628 = vmul.f32 %v613, %v620
    %v629 = vadd.f32 %v627, %v628
    %v630 = vtanh.pop %v629
    %v631 = vmul.f32 %v626, %v630
    %v632 = vld [vmem:[#allocation2 + $0x20] sm:$0xff]
    %v633 = vld [vmem:[#allocation2 + $0x28] sm:$0xff]
    %v634 = vld [vmem:[#allocation2 + $0x30] sm:$0xff]
    %v635 = vld [vmem:[#allocation2 + $0x38] sm:$0xff]
    %636 = vmatprep.subr.mxu0 %v399
    %637 = vmatpush1.msra.mxu0 %v398
    %638 = vmatprep.subr.mxu0 %v403
    %639 = vmatpush1.msra.mxu0 %v402
    %640 = vmatprep.subr.mxu0 %v407
    %641 = vmatpush1.msra.mxu0 %v406
    %642 = vmatprep.subr.mxu0 %v411
    %643 = vmatpush1.msra.mxu0 %v410
    %644 = vmatprep.subr.mxu0 %v415
    %645 = vmatpush1.msra.mxu0 %v414
    %646 = vmatprep.subr.mxu0 %v419
    %647 = vmatpush1.msra.mxu0 %v418
    %648 = vmatprep.subr.mxu0 %v423
    %649 = vmatpush1.msra.mxu0 %v422
    %650 = vmatprep.subr.mxu0 %v427
    %651 = vmatpush1.msra.mxu0 %v426
    %652 = vmatprep.subr.mxu0 %v431
    %653 = vmatpush1.msra.mxu0 %v430
    %654 = vmatprep.subr.mxu0 %v435
    %655 = vmatpush1.msra.mxu0 %v434
    %656 = vmatprep.subr.mxu0 %v439
    %657 = vmatpush1.msra.mxu0 %v438
    %658 = vmatprep.subr.mxu0 %v443
    %659 = vmatpush1.msra.mxu0 %v442
    %660 = vmatprep.subr.mxu0 %v447
    %661 = vmatpush1.msra.mxu0 %v446
    %662 = vmatprep.subr.mxu0 %v451
    %663 = vmatpush1.msra.mxu0 %v450
    %664 = vmatprep.subr.mxu0 %v455
    %665 = vmatpush1.msra.mxu0 %v454
    %666 = vmatprep.subr.mxu0 %v459
    %667 = vmatpush1.msra.mxu0 %v458
    %668 = vmatprep.subr.mxu0 0.0
    %669 = vmatpush1.msra.mxu0 0.0
    %670 = vmatprep.subr.mxu0 0.0
    %671 = vmatpush1.msra.mxu0 0.0
    %672 = vmatprep.subr.mxu0 0.0
    %673 = vmatpush1.msra.mxu0 0.0
    %674 = vmatprep.subr.mxu0 0.0
    %675 = vmatpush1.msra.mxu0 0.0
    %676 = vmatprep.subr.mxu0 0.0
    %677 = vmatpush1.msra.mxu0 0.0
    %678 = vmatprep.subr.mxu0 0.0
    %679 = vmatpush1.msra.mxu0 0.0
    %680 = vmatprep.subr.mxu0 0.0
    %681 = vmatpush1.msra.mxu0 0.0
    %682 = vmatprep.subr.mxu0 0.0
    %683 = vmatpush1.msra.mxu0 0.0
    %684 = vmatprep.subr.mxu0 0.0
    %685 = vmatpush1.msra.mxu0 0.0
    %686 = vmatprep.subr.mxu0 0.0
    %687 = vmatpush1.msra.mxu0 0.0
    %688 = vmatprep.subr.mxu0 0.0
    %689 = vmatpush1.msra.mxu0 0.0
    %690 = vmatprep.subr.mxu0 0.0
    %691 = vmatpush1.msra.mxu0 0.0
    %692 = vmatprep.subr.mxu0 0.0
    %693 = vmatpush1.msra.mxu0 0.0
    %694 = vmatprep.subr.mxu0 0.0
    %695 = vmatpush1.msra.mxu0 0.0
    %696 = vmatprep.subr.mxu0 0.0
    %697 = vmatpush1.msra.mxu0 0.0
    %698 = vmatprep.subr.mxu0 0.0
    %699 = vmatpush1.msra.mxu0 0.0
    %700 = vmatprep.mubr.f32.mxu0 0.0
    %701 = vmatmul.mubr.f32.gmra.mrb[0].mxu0 %v631
    %v702 = vpop.f32.mrb[0].mxu0
    %v703 = vadd.f32 0.0, %v702
    %v704 = vpop.f32.mrb[0].mxu0
    %v705 = vadd.f32 0.0, %v704
    %706 = vdwg.mxu0
    %707 = vmatprep.subr.mxu0 %v401
    %708 = vmatpush1.msra.mxu0 %v400
    %709 = vmatprep.subr.mxu0 %v405
    %710 = vmatpush1.msra.mxu0 %v404
    %711 = vmatprep.subr.mxu0 %v409
    %712 = vmatpush1.msra.mxu0 %v408
    %713 = vmatprep.subr.mxu0 %v413
    %714 = vmatpush1.msra.mxu0 %v412
    %715 = vmatprep.subr.mxu0 %v417
    %716 = vmatpush1.msra.mxu0 %v416
    %717 = vmatprep.subr.mxu0 %v421
    %718 = vmatpush1.msra.mxu0 %v420
    %719 = vmatprep.subr.mxu0 %v425
    %720 = vmatpush1.msra.mxu0 %v424
    %721 = vmatprep.subr.mxu0 %v429
    %722 = vmatpush1.msra.mxu0 %v428
    %723 = vmatprep.subr.mxu0 %v433
    %724 = vmatpush1.msra.mxu0 %v432
    %725 = vmatprep.subr.mxu0 %v437
    %726 = vmatpush1.msra.mxu0 %v436
    %727 = vmatprep.subr.mxu0 %v441
    %728 = vmatpush1.msra.mxu0 %v440
    %729 = vmatprep.subr.mxu0 %v445
    %730 = vmatpush1.msra.mxu0 %v444
    %731 = vmatprep.subr.mxu0 %v449
    %732 = vmatpush1.msra.mxu0 %v448
    %733 = vmatprep.subr.mxu0 %v453
    %734 = vmatpush1.msra.mxu0 %v452
    %735 = vmatprep.subr.mxu0 %v457
    %736 = vmatpush1.msra.mxu0 %v456
    %737 = vmatprep.subr.mxu0 %v461
    %738 = vmatpush1.msra.mxu0 %v460
    %739 = vmatprep.subr.mxu0 0.0
    %740 = vmatpush1.msra.mxu0 0.0
    %741 = vmatprep.subr.mxu0 0.0
    %742 = vmatpush1.msra.mxu0 0.0
    %743 = vmatprep.subr.mxu0 0.0
    %744 = vmatpush1.msra.mxu0 0.0
    %745 = vmatprep.subr.mxu0 0.0
    %746 = vmatpush1.msra.mxu0 0.0
    %747 = vmatprep.subr.mxu0 0.0
    %748 = vmatpush1.msra.mxu0 0.0
    %749 = vmatprep.subr.mxu0 0.0
    %750 = vmatpush1.msra.mxu0 0.0
    %751 = vmatprep.subr.mxu0 0.0
    %752 = vmatpush1.msra.mxu0 0.0
    %753 = vmatprep.subr.mxu0 0.0
    %754 = vmatpush1.msra.mxu0 0.0
    %755 = vmatprep.subr.mxu0 0.0
    %756 = vmatpush1.msra.mxu0 0.0
    %757 = vmatprep.subr.mxu0 0.0
    %758 = vmatpush1.msra.mxu0 0.0
    %759 = vmatprep.subr.mxu0 0.0
    %760 = vmatpush1.msra.mxu0 0.0
    %761 = vmatprep.subr.mxu0 0.0
    %762 = vmatpush1.msra.mxu0 0.0
    %763 = vmatprep.subr.mxu0 0.0
    %764 = vmatpush1.msra.mxu0 0.0
    %765 = vmatprep.subr.mxu0 0.0
    %766 = vmatpush1.msra.mxu0 0.0
    %767 = vmatprep.subr.mxu0 0.0
    %768 = vmatpush1.msra.mxu0 0.0
    %769 = vmatprep.subr.mxu0 0.0
    %770 = vmatpush1.msra.mxu0 0.0
    %771 = vmatprep.mubr.f32.mxu0 0.0
    %772 = vmatmul.mubr.f32.gmra.mrb[0].mxu0 %v631
    %v773 = vpop.f32.mrb[0].mxu0
    %v774 = vadd.f32 0.0, %v773
    %v775 = vpop.f32.mrb[0].mxu0
    %v776 = vadd.f32 0.0, %v775
    %777 = vdwg.mxu0
    %v778 = vadd.f32 %v632, %v703
    %v779 = vadd.f32 %v633, %v705
    %v780 = vadd.f32 %v634, %v774
    %v781 = vadd.f32 %v635, %v776
    %v782 = vxor.u32 %v778, 2147483648
    %v783 = vmul.f32 %v782, 1.442695
    %v784 = vpow.pop %v783
    %v785 = vadd.f32 %v784, 1.0
    %v786 = vrcp.pop %v785
    %v787 = vmul.f32 1.0, %v786
    %v788 = vxor.u32 %v779, 2147483648
    %v789 = vmul.f32 %v788, 1.442695
    %v790 = vpow.pop %v789
    %v791 = vadd.f32 %v790, 1.0
    %v792 = vrcp.pop %v791
    %v793 = vmul.f32 1.0, %v792
    %v794 = vtanh.pop %v780
    %v795 = vxor.u32 %v781, 2147483648
    %v796 = vmul.f32 %v795, 1.442695
    %v797 = vpow.pop %v796
    %v798 = vadd.f32 %v797, 1.0
    %v799 = vrcp.pop %v798
    %v800 = vmul.f32 1.0, %v799
    %v801 = vmul.f32 %v793, %v629
    %v802 = vmul.f32 %v787, %v794
    %v803 = vadd.f32 %v801, %v802
    %v804 = vtanh.pop %v803
    %v805 = vmul.f32 %v800, %v804
    %v806 = vld [vmem:[#allocation2 + $0x40] sm:$0xff]
    %v807 = vld [vmem:[#allocation2 + $0x48] sm:$0xff]
    %v808 = vld [vmem:[#allocation2 + $0x50] sm:$0xff]
    %v809 = vld [vmem:[#allocation2 + $0x58] sm:$0xff]
    %810 = vmatprep.subr.mxu0 %v399
    %811 = vmatpush1.msra.mxu0 %v398
    %812 = vmatprep.subr.mxu0 %v403
    %813 = vmatpush1.msra.mxu0 %v402
    %814 = vmatprep.subr.mxu0 %v407
    %815 = vmatpush1.msra.mxu0 %v406
    %816 = vmatprep.subr.mxu0 %v411
    %817 = vmatpush1.msra.mxu0 %v410
    %818 = vmatprep.subr.mxu0 %v415
    %819 = vmatpush1.msra.mxu0 %v414
    %820 = vmatprep.subr.mxu0 %v419
    %821 = vmatpush1.msra.mxu0 %v418
    %822 = vmatprep.subr.mxu0 %v423
    %823 = vmatpush1.msra.mxu0 %v422
    %824 = vmatprep.subr.mxu0 %v427
    %825 = vmatpush1.msra.mxu0 %v426
    %826 = vmatprep.subr.mxu0 %v431
    %827 = vmatpush1.msra.mxu0 %v430
    %828 = vmatprep.subr.mxu0 %v435
    %829 = vmatpush1.msra.mxu0 %v434
    %830 = vmatprep.subr.mxu0 %v439
    %831 = vmatpush1.msra.mxu0 %v438
    %832 = vmatprep.subr.mxu0 %v443
    %833 = vmatpush1.msra.mxu0 %v442
    %834 = vmatprep.subr.mxu0 %v447
    %835 = vmatpush1.msra.mxu0 %v446
    %836 = vmatprep.subr.mxu0 %v451
    %837 = vmatpush1.msra.mxu0 %v450
    %838 = vmatprep.subr.mxu0 %v455
    %839 = vmatpush1.msra.mxu0 %v454
    %840 = vmatprep.subr.mxu0 %v459
    %841 = vmatpush1.msra.mxu0 %v458
    %842 = vmatprep.subr.mxu0 0.0
    %843 = vmatpush1.msra.mxu0 0.0
    %844 = vmatprep.subr.mxu0 0.0
    %845 = vmatpush1.msra.mxu0 0.0
    %846 = vmatprep.subr.mxu0 0.0
    %847 = vmatpush1.msra.mxu0 0.0
    %848 = vmatprep.subr.mxu0 0.0
    %849 = vmatpush1.msra.mxu0 0.0
    %850 = vmatprep.subr.mxu0 0.0
    %851 = vmatpush1.msra.mxu0 0.0
    %852 = vmatprep.subr.mxu0 0.0
    %853 = vmatpush1.msra.mxu0 0.0
    %854 = vmatprep.subr.mxu0 0.0
    %855 = vmatpush1.msra.mxu0 0.0
    %856 = vmatprep.subr.mxu0 0.0
    %857 = vmatpush1.msra.mxu0 0.0
    %858 = vmatprep.subr.mxu0 0.0
    %859 = vmatpush1.msra.mxu0 0.0
    %860 = vmatprep.subr.mxu0 0.0
    %861 = vmatpush1.msra.mxu0 0.0
    %862 = vmatprep.subr.mxu0 0.0
    %863 = vmatpush1.msra.mxu0 0.0
    %864 = vmatprep.subr.mxu0 0.0
    %865 = vmatpush1.msra.mxu0 0.0
    %866 = vmatprep.subr.mxu0 0.0
    %867 = vmatpush1.msra.mxu0 0.0
    %868 = vmatprep.subr.mxu0 0.0
    %869 = vmatpush1.msra.mxu0 0.0
    %870 = vmatprep.subr.mxu0 0.0
    %871 = vmatpush1.msra.mxu0 0.0
    %872 = vmatprep.subr.mxu0 0.0
    %873 = vmatpush1.msra.mxu0 0.0
    %874 = vmatprep.mubr.f32.mxu0 0.0
    %875 = vmatmul.mubr.f32.gmra.mrb[0].mxu0 %v805
    %v876 = vpop.f32.mrb[0].mxu0
    %v877 = vadd.f32 0.0, %v876
    %v878 = vpop.f32.mrb[0].mxu0
    %v879 = vadd.f32 0.0, %v878
    %880 = vdwg.mxu0
    %881 = vmatprep.subr.mxu0 %v401
    %882 = vmatpush1.msra.mxu0 %v400
    %883 = vmatprep.subr.mxu0 %v405
    %884 = vmatpush1.msra.mxu0 %v404
    %885 = vmatprep.subr.mxu0 %v409
    %886 = vmatpush1.msra.mxu0 %v408
    %887 = vmatprep.subr.mxu0 %v413
    %888 = vmatpush1.msra.mxu0 %v412
    %889 = vmatprep.subr.mxu0 %v417
    %890 = vmatpush1.msra.mxu0 %v416
    %891 = vmatprep.subr.mxu0 %v421
    %892 = vmatpush1.msra.mxu0 %v420
    %893 = vmatprep.subr.mxu0 %v425
    %894 = vmatpush1.msra.mxu0 %v424
    %895 = vmatprep.subr.mxu0 %v429
    %896 = vmatpush1.msra.mxu0 %v428
    %897 = vmatprep.subr.mxu0 %v433
    %898 = vmatpush1.msra.mxu0 %v432
    %899 = vmatprep.subr.mxu0 %v437
    %900 = vmatpush1.msra.mxu0 %v436
    %901 = vmatprep.subr.mxu0 %v441
    %902 = vmatpush1.msra.mxu0 %v440
    %903 = vmatprep.subr.mxu0 %v445
    %904 = vmatpush1.msra.mxu0 %v444
    %905 = vmatprep.subr.mxu0 %v449
    %906 = vmatpush1.msra.mxu0 %v448
    %907 = vmatprep.subr.mxu0 %v453
    %908 = vmatpush1.msra.mxu0 %v452
    %909 = vmatprep.subr.mxu0 %v457
    %910 = vmatpush1.msra.mxu0 %v456
    %911 = vmatprep.subr.mxu0 %v461
    %912 = vmatpush1.msra.mxu0 %v460
    %913 = vmatprep.subr.mxu0 0.0
    %914 = vmatpush1.msra.mxu0 0.0
    %915 = vmatprep.subr.mxu0 0.0
    %916 = vmatpush1.msra.mxu0 0.0
    %917 = vmatprep.subr.mxu0 0.0
    %918 = vmatpush1.msra.mxu0 0.0
    %919 = vmatprep.subr.mxu0 0.0
    %920 = vmatpush1.msra.mxu0 0.0
    %921 = vmatprep.subr.mxu0 0.0
    %922 = vmatpush1.msra.mxu0 0.0
    %923 = vmatprep.subr.mxu0 0.0
    %924 = vmatpush1.msra.mxu0 0.0
    %925 = vmatprep.subr.mxu0 0.0
    %926 = vmatpush1.msra.mxu0 0.0
    %927 = vmatprep.subr.mxu0 0.0
    %928 = vmatpush1.msra.mxu0 0.0
    %929 = vmatprep.subr.mxu0 0.0
    %930 = vmatpush1.msra.mxu0 0.0
    %931 = vmatprep.subr.mxu0 0.0
    %932 = vmatpush1.msra.mxu0 0.0
    %933 = vmatprep.subr.mxu0 0.0
    %934 = vmatpush1.msra.mxu0 0.0
    %935 = vmatprep.subr.mxu0 0.0
    %936 = vmatpush1.msra.mxu0 0.0
    %937 = vmatprep.subr.mxu0 0.0
    %938 = vmatpush1.msra.mxu0 0.0
    %939 = vmatprep.subr.mxu0 0.0
    %940 = vmatpush1.msra.mxu0 0.0
    %941 = vmatprep.subr.mxu0 0.0
    %942 = vmatpush1.msra.mxu0 0.0
    %943 = vmatprep.subr.mxu0 0.0
    %944 = vmatpush1.msra.mxu0 0.0
    %945 = vmatprep.mubr.f32.mxu0 0.0
    %946 = vmatmul.mubr.f32.gmra.mrb[0].mxu0 %v805
    %v947 = vpop.f32.mrb[0].mxu0
    %v948 = vadd.f32 0.0, %v947
    %v949 = vpop.f32.mrb[0].mxu0
    %v950 = vadd.f32 0.0, %v949
    %951 = vdwg.mxu0
    %v952 = vadd.f32 %v806, %v877
    %v953 = vadd.f32 %v807, %v879
    %v954 = vadd.f32 %v808, %v948
    %v955 = vadd.f32 %v809, %v950
    %v956 = vxor.u32 %v952, 2147483648
    %v957 = vmul.f32 %v956, 1.442695
    %v958 = vpow.pop %v957
    %v959 = vadd.f32 %v958, 1.0
    %v960 = vrcp.pop %v959
    %v961 = vmul.f32 1.0, %v960
    %v962 = vxor.u32 %v953, 2147483648
    %v963 = vmul.f32 %v962, 1.442695
    %v964 = vpow.pop %v963
    %v965 = vadd.f32 %v964, 1.0
    %v966 = vrcp.pop %v965
    %v967 = vmul.f32 1.0, %v966
    %v968 = vtanh.pop %v954
    %v969 = vxor.u32 %v955, 2147483648
    %v970 = vmul.f32 %v969, 1.442695
    %v971 = vpow.pop %v970
    %v972 = vadd.f32 %v971, 1.0
    %v973 = vrcp.pop %v972
    %v974 = vmul.f32 1.0, %v973
    %v975 = vmul.f32 %v967, %v803
    %v976 = vmul.f32 %v961, %v968
    %v977 = vadd.f32 %v975, %v976
    %v978 = vtanh.pop %v977
    %v979 = vmul.f32 %v974, %v978
    %v980 = vld [vmem:[#allocation2 + $0x60] sm:$0xff]
    %v981 = vld [vmem:[#allocation2 + $0x68] sm:$0xff]
    %v982 = vld [vmem:[#allocation2 + $0x70] sm:$0xff]
    %v983 = vld [vmem:[#allocation2 + $0x78] sm:$0xff]
    %984 = vmatprep.subr.mxu0 %v399
    %985 = vmatpush1.msra.mxu0 %v398
    %986 = vmatprep.subr.mxu0 %v403
    %987 = vmatpush1.msra.mxu0 %v402
    %988 = vmatprep.subr.mxu0 %v407
    %989 = vmatpush1.msra.mxu0 %v406
    %990 = vmatprep.subr.mxu0 %v411
    %991 = vmatpush1.msra.mxu0 %v410
    %992 = vmatprep.subr.mxu0 %v415
    %993 = vmatpush1.msra.mxu0 %v414
    %994 = vmatprep.subr.mxu0 %v419
    %995 = vmatpush1.msra.mxu0 %v418
    %996 = vmatprep.subr.mxu0 %v423
    %997 = vmatpush1.msra.mxu0 %v422
    %998 = vmatprep.subr.mxu0 %v427
    %999 = vmatpush1.msra.mxu0 %v426
    %1000 = vmatprep.subr.mxu0 %v431
    %1001 = vmatpush1.msra.mxu0 %v430
    %1002 = vmatprep.subr.mxu0 %v435
    %1003 = vmatpush1.msra.mxu0 %v434
    %1004 = vmatprep.subr.mxu0 %v439
    %1005 = vmatpush1.msra.mxu0 %v438
    %1006 = vmatprep.subr.mxu0 %v443
    %1007 = vmatpush1.msra.mxu0 %v442
    %1008 = vmatprep.subr.mxu0 %v447
    %1009 = vmatpush1.msra.mxu0 %v446
    %1010 = vmatprep.subr.mxu0 %v451
    %1011 = vmatpush1.msra.mxu0 %v450
    %1012 = vmatprep.subr.mxu0 %v455
    %1013 = vmatpush1.msra.mxu0 %v454
    %1014 = vmatprep.subr.mxu0 %v459
    %1015 = vmatpush1.msra.mxu0 %v458
    %1016 = vmatprep.subr.mxu0 0.0
    %1017 = vmatpush1.msra.mxu0 0.0
    %1018 = vmatprep.subr.mxu0 0.0
    %1019 = vmatpush1.msra.mxu0 0.0
    %1020 = vmatprep.subr.mxu0 0.0
    %1021 = vmatpush1.msra.mxu0 0.0
    %1022 = vmatprep.subr.mxu0 0.0
    %1023 = vmatpush1.msra.mxu0 0.0
    %1024 = vmatprep.subr.mxu0 0.0
    %1025 = vmatpush1.msra.mxu0 0.0
    %1026 = vmatprep.subr.mxu0 0.0
    %1027 = vmatpush1.msra.mxu0 0.0
    %1028 = vmatprep.subr.mxu0 0.0
    %1029 = vmatpush1.msra.mxu0 0.0
    %1030 = vmatprep.subr.mxu0 0.0
    %1031 = vmatpush1.msra.mxu0 0.0
    %1032 = vmatprep.subr.mxu0 0.0
    %1033 = vmatpush1.msra.mxu0 0.0
    %1034 = vmatprep.subr.mxu0 0.0
    %1035 = vmatpush1.msra.mxu0 0.0
    %1036 = vmatprep.subr.mxu0 0.0
    %1037 = vmatpush1.msra.mxu0 0.0
    %1038 = vmatprep.subr.mxu0 0.0
    %1039 = vmatpush1.msra.mxu0 0.0
    %1040 = vmatprep.subr.mxu0 0.0
    %1041 = vmatpush1.msra.mxu0 0.0
    %1042 = vmatprep.subr.mxu0 0.0
    %1043 = vmatpush1.msra.mxu0 0.0
    %1044 = vmatprep.subr.mxu0 0.0
    %1045 = vmatpush1.msra.mxu0 0.0
    %1046 = vmatprep.subr.mxu0 0.0
    %1047 = vmatpush1.msra.mxu0 0.0
    %1048 = vmatprep.mubr.f32.mxu0 0.0
    %1049 = vmatmul.mubr.f32.gmra.mrb[0].mxu0 %v979
    %v1050 = vpop.f32.mrb[0].mxu0
    %v1051 = vadd.f32 0.0, %v1050
    %v1052 = vpop.f32.mrb[0].mxu0
    %v1053 = vadd.f32 0.0, %v1052
    %1054 = vdwg.mxu0
    %1055 = vmatprep.subr.mxu0 %v401
    %1056 = vmatpush1.msra.mxu0 %v400
    %1057 = vmatprep.subr.mxu0 %v405
    %1058 = vmatpush1.msra.mxu0 %v404
    %1059 = vmatprep.subr.mxu0 %v409
    %1060 = vmatpush1.msra.mxu0 %v408
    %1061 = vmatprep.subr.mxu0 %v413
    %1062 = vmatpush1.msra.mxu0 %v412
    %1063 = vmatprep.subr.mxu0 %v417
    %1064 = vmatpush1.msra.mxu0 %v416
    %1065 = vmatprep.subr.mxu0 %v421
    %1066 = vmatpush1.msra.mxu0 %v420
    %1067 = vmatprep.subr.mxu0 %v425
    %1068 = vmatpush1.msra.mxu0 %v424
    %1069 = vmatprep.subr.mxu0 %v429
    %1070 = vmatpush1.msra.mxu0 %v428
    %1071 = vmatprep.subr.mxu0 %v433
    %1072 = vmatpush1.msra.mxu0 %v432
    %1073 = vmatprep.subr.mxu0 %v437
    %1074 = vmatpush1.msra.mxu0 %v436
    %1075 = vmatprep.subr.mxu0 %v441
    %1076 = vmatpush1.msra.mxu0 %v440
    %1077 = vmatprep.subr.mxu0 %v445
    %1078 = vmatpush1.msra.mxu0 %v444
    %1079 = vmatprep.subr.mxu0 %v449
    %1080 = vmatpush1.msra.mxu0 %v448
    %1081 = vmatprep.subr.mxu0 %v453
    %1082 = vmatpush1.msra.mxu0 %v452
    %1083 = vmatprep.subr.mxu0 %v457
    %1084 = vmatpush1.msra.mxu0 %v456
    %1085 = vmatprep.subr.mxu0 %v461
    %1086 = vmatpush1.msra.mxu0 %v460
    %1087 = vmatprep.subr.mxu0 0.0
    %1088 = vmatpush1.msra.mxu0 0.0
    %1089 = vmatprep.subr.mxu0 0.0
    %1090 = vmatpush1.msra.mxu0 0.0
    %1091 = vmatprep.subr.mxu0 0.0
    %1092 = vmatpush1.msra.mxu0 0.0
    %1093 = vmatprep.subr.mxu0 0.0
    %1094 = vmatpush1.msra.mxu0 0.0
    %1095 = vmatprep.subr.mxu0 0.0
    %1096 = vmatpush1.msra.mxu0 0.0
    %1097 = vmatprep.subr.mxu0 0.0
    %1098 = vmatpush1.msra.mxu0 0.0
    %1099 = vmatprep.subr.mxu0 0.0
    %1100 = vmatpush1.msra.mxu0 0.0
    %1101 = vmatprep.subr.mxu0 0.0
    %1102 = vmatpush1.msra.mxu0 0.0
    %1103 = vmatprep.subr.mxu0 0.0
    %1104 = vmatpush1.msra.mxu0 0.0
    %1105 = vmatprep.subr.mxu0 0.0
    %1106 = vmatpush1.msra.mxu0 0.0
    %1107 = vmatprep.subr.mxu0 0.0
    %1108 = vmatpush1.msra.mxu0 0.0
    %1109 = vmatprep.subr.mxu0 0.0
    %1110 = vmatpush1.msra.mxu0 0.0
    %1111 = vmatprep.subr.mxu0 0.0
    %1112 = vmatpush1.msra.mxu0 0.0
    %1113 = vmatprep.subr.mxu0 0.0
    %1114 = vmatpush1.msra.mxu0 0.0
    %1115 = vmatprep.subr.mxu0 0.0
    %1116 = vmatpush1.msra.mxu0 0.0
    %1117 = vmatprep.subr.mxu0 0.0
    %1118 = vmatpush1.msra.mxu0 0.0
    %1119 = vmatprep.mubr.f32.mxu0 0.0
    %1120 = vmatmul.mubr.f32.gmra.mrb[0].mxu0 %v979
    %v1121 = vpop.f32.mrb[0].mxu0
    %v1122 = vadd.f32 0.0, %v1121
    %v1123 = vpop.f32.mrb[0].mxu0
    %v1124 = vadd.f32 0.0, %v1123
    %1125 = vdwg.mxu0
    %v1126 = vadd.f32 %v980, %v1051
    %v1127 = vadd.f32 %v981, %v1053
    %v1128 = vadd.f32 %v982, %v1122
    %v1129 = vadd.f32 %v983, %v1124
    %v1130 = vxor.u32 %v1126, 2147483648
    %v1131 = vmul.f32 %v1130, 1.442695
    %v1132 = vpow.pop %v1131
    %v1133 = vadd.f32 %v1132, 1.0
    %v1134 = vrcp.pop %v1133
    %v1135 = vmul.f32 1.0, %v1134
    %v1136 = vxor.u32 %v1127, 2147483648
    %v1137 = vmul.f32 %v1136, 1.442695
    %v1138 = vpow.pop %v1137
    %v1139 = vadd.f32 %v1138, 1.0
    %v1140 = vrcp.pop %v1139
    %v1141 = vmul.f32 1.0, %v1140
    %v1142 = vtanh.pop %v1128
    %v1143 = vxor.u32 %v1129, 2147483648
    %v1144 = vmul.f32 %v1143, 1.442695
    %v1145 = vpow.pop %v1144
    %v1146 = vadd.f32 %v1145, 1.0
    %v1147 = vrcp.pop %v1146
    %v1148 = vmul.f32 1.0, %v1147
    %v1149 = vmul.f32 %v1141, %v977
    %v1150 = vmul.f32 %v1135, %v1142
    %v1151 = vadd.f32 %v1149, %v1150
    %v1152 = vtanh.pop %v1151
    %v1153 = vmul.f32 %v1148, %v1152
    %v1154 = vld [vmem:[#allocation2 + $0x80] sm:$0xff]
    %v1155 = vld [vmem:[#allocation2 + $0x88] sm:$0xff]
    %v1156 = vld [vmem:[#allocation2 + $0x90] sm:$0xff]
    %v1157 = vld [vmem:[#allocation2 + $0x98] sm:$0xff]
    %1158 = vmatprep.subr.mxu0 %v399
    %1159 = vmatpush1.msra.mxu0 %v398
    %1160 = vmatprep.subr.mxu0 %v403
    %1161 = vmatpush1.msra.mxu0 %v402
    %1162 = vmatprep.subr.mxu0 %v407
    %1163 = vmatpush1.msra.mxu0 %v406
    %1164 = vmatprep.subr.mxu0 %v411
    %1165 = vmatpush1.msra.mxu0 %v410
    %1166 = vmatprep.subr.mxu0 %v415
    %1167 = vmatpush1.msra.mxu0 %v414
    %1168 = vmatprep.subr.mxu0 %v419
    %1169 = vmatpush1.msra.mxu0 %v418
    %1170 = vmatprep.subr.mxu0 %v423
    %1171 = vmatpush1.msra.mxu0 %v422
    %1172 = vmatprep.subr.mxu0 %v427
    %1173 = vmatpush1.msra.mxu0 %v426
    %1174 = vmatprep.subr.mxu0 %v431
    %1175 = vmatpush1.msra.mxu0 %v430
    %1176 = vmatprep.subr.mxu0 %v435
    %1177 = vmatpush1.msra.mxu0 %v434
    %1178 = vmatprep.subr.mxu0 %v439
    %1179 = vmatpush1.msra.mxu0 %v438
    %1180 = vmatprep.subr.mxu0 %v443
    %1181 = vmatpush1.msra.mxu0 %v442
    %1182 = vmatprep.subr.mxu0 %v447
    %1183 = vmatpush1.msra.mxu0 %v446
    %1184 = vmatprep.subr.mxu0 %v451
    %1185 = vmatpush1.msra.mxu0 %v450
    %1186 = vmatprep.subr.mxu0 %v455
    %1187 = vmatpush1.msra.mxu0 %v454
    %1188 = vmatprep.subr.mxu0 %v459
    %1189 = vmatpush1.msra.mxu0 %v458
    %1190 = vmatprep.subr.mxu0 0.0
    %1191 = vmatpush1.msra.mxu0 0.0
    %1192 = vmatprep.subr.mxu0 0.0
    %1193 = vmatpush1.msra.mxu0 0.0
    %1194 = vmatprep.subr.mxu0 0.0
    %1195 = vmatpush1.msra.mxu0 0.0
    %1196 = vmatprep.subr.mxu0 0.0
    %1197 = vmatpush1.msra.mxu0 0.0
    %1198 = vmatprep.subr.mxu0 0.0
    %1199 = vmatpush1.msra.mxu0 0.0
    %1200 = vmatprep.subr.mxu0 0.0
    %1201 = vmatpush1.msra.mxu0 0.0
    %1202 = vmatprep.subr.mxu0 0.0
    %1203 = vmatpush1.msra.mxu0 0.0
    %1204 = vmatprep.subr.mxu0 0.0
    %1205 = vmatpush1.msra.mxu0 0.0
    %1206 = vmatprep.subr.mxu0 0.0
    %1207 = vmatpush1.msra.mxu0 0.0
    %1208 = vmatprep.subr.mxu0 0.0
    %1209 = vmatpush1.msra.mxu0 0.0
    %1210 = vmatprep.subr.mxu0 0.0
    %1211 = vmatpush1.msra.mxu0 0.0
    %1212 = vmatprep.subr.mxu0 0.0
    %1213 = vmatpush1.msra.mxu0 0.0
    %1214 = vmatprep.subr.mxu0 0.0
    %1215 = vmatpush1.msra.mxu0 0.0
    %1216 = vmatprep.subr.mxu0 0.0
    %1217 = vmatpush1.msra.mxu0 0.0
    %1218 = vmatprep.subr.mxu0 0.0
    %1219 = vmatpush1.msra.mxu0 0.0
    %1220 = vmatprep.subr.mxu0 0.0
    %1221 = vmatpush1.msra.mxu0 0.0
    %1222 = vmatprep.mubr.f32.mxu0 0.0
    %1223 = vmatmul.mubr.f32.gmra.mrb[0].mxu0 %v1153
    %v1224 = vpop.f32.mrb[0].mxu0
    %v1225 = vadd.f32 0.0, %v1224
    %v1226 = vpop.f32.mrb[0].mxu0
    %v1227 = vadd.f32 0.0, %v1226
    %1228 = vdwg.mxu0
    %1229 = vmatprep.subr.mxu0 %v401
    %1230 = vmatpush1.msra.mxu0 %v400
    %1231 = vmatprep.subr.mxu0 %v405
    %1232 = vmatpush1.msra.mxu0 %v404
    %1233 = vmatprep.subr.mxu0 %v409
    %1234 = vmatpush1.msra.mxu0 %v408
    %1235 = vmatprep.subr.mxu0 %v413
    %1236 = vmatpush1.msra.mxu0 %v412
    %1237 = vmatprep.subr.mxu0 %v417
    %1238 = vmatpush1.msra.mxu0 %v416
    %1239 = vmatprep.subr.mxu0 %v421
    %1240 = vmatpush1.msra.mxu0 %v420
    %1241 = vmatprep.subr.mxu0 %v425
    %1242 = vmatpush1.msra.mxu0 %v424
    %1243 = vmatprep.subr.mxu0 %v429
    %1244 = vmatpush1.msra.mxu0 %v428
    %1245 = vmatprep.subr.mxu0 %v433
    %1246 = vmatpush1.msra.mxu0 %v432
    %1247 = vmatprep.subr.mxu0 %v437
    %1248 = vmatpush1.msra.mxu0 %v436
    %1249 = vmatprep.subr.mxu0 %v441
    %1250 = vmatpush1.msra.mxu0 %v440
    %1251 = vmatprep.subr.mxu0 %v445
    %1252 = vmatpush1.msra.mxu0 %v444
    %1253 = vmatprep.subr.mxu0 %v449
    %1254 = vmatpush1.msra.mxu0 %v448
    %1255 = vmatprep.subr.mxu0 %v453
    %1256 = vmatpush1.msra.mxu0 %v452
    %1257 = vmatprep.subr.mxu0 %v457
    %1258 = vmatpush1.msra.mxu0 %v456
    %1259 = vmatprep.subr.mxu0 %v461
    %1260 = vmatpush1.msra.mxu0 %v460
    %1261 = vmatprep.subr.mxu0 0.0
    %1262 = vmatpush1.msra.mxu0 0.0
    %1263 = vmatprep.subr.mxu0 0.0
    %1264 = vmatpush1.msra.mxu0 0.0
    %1265 = vmatprep.subr.mxu0 0.0
    %1266 = vmatpush1.msra.mxu0 0.0
    %1267 = vmatprep.subr.mxu0 0.0
    %1268 = vmatpush1.msra.mxu0 0.0
    %1269 = vmatprep.subr.mxu0 0.0
    %1270 = vmatpush1.msra.mxu0 0.0
    %1271 = vmatprep.subr.mxu0 0.0
    %1272 = vmatpush1.msra.mxu0 0.0
    %1273 = vmatprep.subr.mxu0 0.0
    %1274 = vmatpush1.msra.mxu0 0.0
    %1275 = vmatprep.subr.mxu0 0.0
    %1276 = vmatpush1.msra.mxu0 0.0
    %1277 = vmatprep.subr.mxu0 0.0
    %1278 = vmatpush1.msra.mxu0 0.0
    %1279 = vmatprep.subr.mxu0 0.0
    %1280 = vmatpush1.msra.mxu0 0.0
    %1281 = vmatprep.subr.mxu0 0.0
    %1282 = vmatpush1.msra.mxu0 0.0
    %1283 = vmatprep.subr.mxu0 0.0
    %1284 = vmatpush1.msra.mxu0 0.0
    %1285 = vmatprep.subr.mxu0 0.0
    %1286 = vmatpush1.msra.mxu0 0.0
    %1287 = vmatprep.subr.mxu0 0.0
    %1288 = vmatpush1.msra.mxu0 0.0
    %1289 = vmatprep.subr.mxu0 0.0
    %1290 = vmatpush1.msra.mxu0 0.0
    %1291 = vmatprep.subr.mxu0 0.0
    %1292 = vmatpush1.msra.mxu0 0.0
    %1293 = vmatprep.mubr.f32.mxu0 0.0
    %1294 = vmatmul.mubr.f32.gmra.mrb[0].mxu0 %v1153
    %v1295 = vpop.f32.mrb[0].mxu0
    %v1296 = vadd.f32 0.0, %v1295
    %v1297 = vpop.f32.mrb[0].mxu0
    %v1298 = vadd.f32 0.0, %v1297
    %1299 = vdwg.mxu0
    %v1300 = vadd.f32 %v1154, %v1225
    %v1301 = vadd.f32 %v1155, %v1227
    %v1302 = vadd.f32 %v1156, %v1296
    %v1303 = vadd.f32 %v1157, %v1298
    %v1304 = vxor.u32 %v1300, 2147483648
    %v1305 = vmul.f32 %v1304, 1.442695
    %v1306 = vpow.pop %v1305
    %v1307 = vadd.f32 %v1306, 1.0
    %v1308 = vrcp.pop %v1307
    %v1309 = vmul.f32 1.0, %v1308
    %v1310 = vxor.u32 %v1301, 2147483648
    %v1311 = vmul.f32 %v1310, 1.442695
    %v1312 = vpow.pop %v1311
    %v1313 = vadd.f32 %v1312, 1.0
    %v1314 = vrcp.pop %v1313
    %v1315 = vmul.f32 1.0, %v1314
    %v1316 = vtanh.pop %v1302
    %v1317 = vxor.u32 %v1303, 2147483648
    %v1318 = vmul.f32 %v1317, 1.442695
    %v1319 = vpow.pop %v1318
    %v1320 = vadd.f32 %v1319, 1.0
    %v1321 = vrcp.pop %v1320
    %v1322 = vmul.f32 1.0, %v1321
    %v1323 = vmul.f32 %v1315, %v1151
    %v1324 = vmul.f32 %v1309, %v1316
    %v1325 = vadd.f32 %v1323, %v1324
    %v1326 = vtanh.pop %v1325
    %v1327 = vmul.f32 %v1322, %v1326
    %v1328 = vld [vmem:[#allocation2 + $0xa0] sm:$0xff]
    %v1329 = vld [vmem:[#allocation2 + $0xa8] sm:$0xff]
    %v1330 = vld [vmem:[#allocation2 + $0xb0] sm:$0xff]
    %v1331 = vld [vmem:[#allocation2 + $0xb8] sm:$0xff]
    %1332 = vmatprep.subr.mxu0 %v399
    %1333 = vmatpush1.msra.mxu0 %v398
    %1334 = vmatprep.subr.mxu0 %v403
    %1335 = vmatpush1.msra.mxu0 %v402
    %1336 = vmatprep.subr.mxu0 %v407
    %1337 = vmatpush1.msra.mxu0 %v406
    %1338 = vmatprep.subr.mxu0 %v411
    %1339 = vmatpush1.msra.mxu0 %v410
    %1340 = vmatprep.subr.mxu0 %v415
    %1341 = vmatpush1.msra.mxu0 %v414
    %1342 = vmatprep.subr.mxu0 %v419
    %1343 = vmatpush1.msra.mxu0 %v418
    %1344 = vmatprep.subr.mxu0 %v423
    %1345 = vmatpush1.msra.mxu0 %v422
    %1346 = vmatprep.subr.mxu0 %v427
    %1347 = vmatpush1.msra.mxu0 %v426
    %1348 = vmatprep.subr.mxu0 %v431
    %1349 = vmatpush1.msra.mxu0 %v430
    %1350 = vmatprep.subr.mxu0 %v435
    %1351 = vmatpush1.msra.mxu0 %v434
    %1352 = vmatprep.subr.mxu0 %v439
    %1353 = vmatpush1.msra.mxu0 %v438
    %1354 = vmatprep.subr.mxu0 %v443
    %1355 = vmatpush1.msra.mxu0 %v442
    %1356 = vmatprep.subr.mxu0 %v447
    %1357 = vmatpush1.msra.mxu0 %v446
    %1358 = vmatprep.subr.mxu0 %v451
    %1359 = vmatpush1.msra.mxu0 %v450
    %1360 = vmatprep.subr.mxu0 %v455
    %1361 = vmatpush1.msra.mxu0 %v454
    %1362 = vmatprep.subr.mxu0 %v459
    %1363 = vmatpush1.msra.mxu0 %v458
    %1364 = vmatprep.subr.mxu0 0.0
    %1365 = vmatpush1.msra.mxu0 0.0
    %1366 = vmatprep.subr.mxu0 0.0
    %1367 = vmatpush1.msra.mxu0 0.0
    %1368 = vmatprep.subr.mxu0 0.0
    %1369 = vmatpush1.msra.mxu0 0.0
    %1370 = vmatprep.subr.mxu0 0.0
    %1371 = vmatpush1.msra.mxu0 0.0
    %1372 = vmatprep.subr.mxu0 0.0
    %1373 = vmatpush1.msra.mxu0 0.0
    %1374 = vmatprep.subr.mxu0 0.0
    %1375 = vmatpush1.msra.mxu0 0.0
    %1376 = vmatprep.subr.mxu0 0.0
    %1377 = vmatpush1.msra.mxu0 0.0
    %1378 = vmatprep.subr.mxu0 0.0
    %1379 = vmatpush1.msra.mxu0 0.0
    %1380 = vmatprep.subr.mxu0 0.0
    %1381 = vmatpush1.msra.mxu0 0.0
    %1382 = vmatprep.subr.mxu0 0.0
    %1383 = vmatpush1.msra.mxu0 0.0
    %1384 = vmatprep.subr.mxu0 0.0
    %1385 = vmatpush1.msra.mxu0 0.0
    %1386 = vmatprep.subr.mxu0 0.0
    %1387 = vmatpush1.msra.mxu0 0.0
    %1388 = vmatprep.subr.mxu0 0.0
    %1389 = vmatpush1.msra.mxu0 0.0
    %1390 = vmatprep.subr.mxu0 0.0
    %1391 = vmatpush1.msra.mxu0 0.0
    %1392 = vmatprep.subr.mxu0 0.0
    %1393 = vmatpush1.msra.mxu0 0.0
    %1394 = vmatprep.subr.mxu0 0.0
    %1395 = vmatpush1.msra.mxu0 0.0
    %1396 = vmatprep.mubr.f32.mxu0 0.0
    %1397 = vmatmul.mubr.f32.gmra.mrb[0].mxu0 %v1327
    %v1398 = vpop.f32.mrb[0].mxu0
    %v1399 = vadd.f32 0.0, %v1398
    %v1400 = vpop.f32.mrb[0].mxu0
    %v1401 = vadd.f32 0.0, %v1400
    %1402 = vdwg.mxu0
    %1403 = vmatprep.subr.mxu0 %v401
    %1404 = vmatpush1.msra.mxu0 %v400
    %1405 = vmatprep.subr.mxu0 %v405
    %1406 = vmatpush1.msra.mxu0 %v404
    %1407 = vmatprep.subr.mxu0 %v409
    %1408 = vmatpush1.msra.mxu0 %v408
    %1409 = vmatprep.subr.mxu0 %v413
    %1410 = vmatpush1.msra.mxu0 %v412
    %1411 = vmatprep.subr.mxu0 %v417
    %1412 = vmatpush1.msra.mxu0 %v416
    %1413 = vmatprep.subr.mxu0 %v421
    %1414 = vmatpush1.msra.mxu0 %v420
    %1415 = vmatprep.subr.mxu0 %v425
    %1416 = vmatpush1.msra.mxu0 %v424
    %1417 = vmatprep.subr.mxu0 %v429
    %1418 = vmatpush1.msra.mxu0 %v428
    %1419 = vmatprep.subr.mxu0 %v433
    %1420 = vmatpush1.msra.mxu0 %v432
    %1421 = vmatprep.subr.mxu0 %v437
    %1422 = vmatpush1.msra.mxu0 %v436
    %1423 = vmatprep.subr.mxu0 %v441
    %1424 = vmatpush1.msra.mxu0 %v440
    %1425 = vmatprep.subr.mxu0 %v445
    %1426 = vmatpush1.msra.mxu0 %v444
    %1427 = vmatprep.subr.mxu0 %v449
    %1428 = vmatpush1.msra.mxu0 %v448
    %1429 = vmatprep.subr.mxu0 %v453
    %1430 = vmatpush1.msra.mxu0 %v452
    %1431 = vmatprep.subr.mxu0 %v457
    %1432 = vmatpush1.msra.mxu0 %v456
    %1433 = vmatprep.subr.mxu0 %v461
    %1434 = vmatpush1.msra.mxu0 %v460
    %1435 = vmatprep.subr.mxu0 0.0
    %1436 = vmatpush1.msra.mxu0 0.0
    %1437 = vmatprep.subr.mxu0 0.0
    %1438 = vmatpush1.msra.mxu0 0.0
    %1439 = vmatprep.subr.mxu0 0.0
    %1440 = vmatpush1.msra.mxu0 0.0
    %1441 = vmatprep.subr.mxu0 0.0
    %1442 = vmatpush1.msra.mxu0 0.0
    %1443 = vmatprep.subr.mxu0 0.0
    %1444 = vmatpush1.msra.mxu0 0.0
    %1445 = vmatprep.subr.mxu0 0.0
    %1446 = vmatpush1.msra.mxu0 0.0
    %1447 = vmatprep.subr.mxu0 0.0
    %1448 = vmatpush1.msra.mxu0 0.0
    %1449 = vmatprep.subr.mxu0 0.0
    %1450 = vmatpush1.msra.mxu0 0.0
    %1451 = vmatprep.subr.mxu0 0.0
    %1452 = vmatpush1.msra.mxu0 0.0
    %1453 = vmatprep.subr.mxu0 0.0
    %1454 = vmatpush1.msra.mxu0 0.0
    %1455 = vmatprep.subr.mxu0 0.0
    %1456 = vmatpush1.msra.mxu0 0.0
    %1457 = vmatprep.subr.mxu0 0.0
    %1458 = vmatpush1.msra.mxu0 0.0
    %1459 = vmatprep.subr.mxu0 0.0
    %1460 = vmatpush1.msra.mxu0 0.0
    %1461 = vmatprep.subr.mxu0 0.0
    %1462 = vmatpush1.msra.mxu0 0.0
    %1463 = vmatprep.subr.mxu0 0.0
    %1464 = vmatpush1.msra.mxu0 0.0
    %1465 = vmatprep.subr.mxu0 0.0
    %1466 = vmatpush1.msra.mxu0 0.0
    %1467 = vmatprep.mubr.f32.mxu0 0.0
    %1468 = vmatmul.mubr.f32.gmra.mrb[0].mxu0 %v1327
    %v1469 = vpop.f32.mrb[0].mxu0
    %v1470 = vadd.f32 0.0, %v1469
    %v1471 = vpop.f32.mrb[0].mxu0
    %v1472 = vadd.f32 0.0, %v1471
    %1473 = vdwg.mxu0
    %v1474 = vadd.f32 %v1328, %v1399
    %v1475 = vadd.f32 %v1329, %v1401
    %v1476 = vadd.f32 %v1330, %v1470
    %v1477 = vadd.f32 %v1331, %v1472
    %v1478 = vxor.u32 %v1474, 2147483648
    %v1479 = vmul.f32 %v1478, 1.442695
    %v1480 = vpow.pop %v1479
    %v1481 = vadd.f32 %v1480, 1.0
    %v1482 = vrcp.pop %v1481
    %v1483 = vmul.f32 1.0, %v1482
    %v1484 = vxor.u32 %v1475, 2147483648
    %v1485 = vmul.f32 %v1484, 1.442695
    %v1486 = vpow.pop %v1485
    %v1487 = vadd.f32 %v1486, 1.0
    %v1488 = vrcp.pop %v1487
    %v1489 = vmul.f32 1.0, %v1488
    %v1490 = vtanh.pop %v1476
    %v1491 = vxor.u32 %v1477, 2147483648
    %v1492 = vmul.f32 %v1491, 1.442695
    %v1493 = vpow.pop %v1492
    %v1494 = vadd.f32 %v1493, 1.0
    %v1495 = vrcp.pop %v1494
    %v1496 = vmul.f32 1.0, %v1495
    %v1497 = vmul.f32 %v1489, %v1325
    %v1498 = vmul.f32 %v1483, %v1490
    %v1499 = vadd.f32 %v1497, %v1498
    %v1500 = vtanh.pop %v1499
    %v1501 = vmul.f32 %v1496, %v1500
    %v1502 = vld [vmem:[#allocation2 + $0xc0] sm:$0xff]
    %v1503 = vld [vmem:[#allocation2 + $0xc8] sm:$0xff]
    %v1504 = vld [vmem:[#allocation2 + $0xd0] sm:$0xff]
    %v1505 = vld [vmem:[#allocation2 + $0xd8] sm:$0xff]
    %1506 = vmatprep.subr.mxu0 %v399
    %1507 = vmatpush1.msra.mxu0 %v398
    %1508 = vmatprep.subr.mxu0 %v403
    %1509 = vmatpush1.msra.mxu0 %v402
    %1510 = vmatprep.subr.mxu0 %v407
    %1511 = vmatpush1.msra.mxu0 %v406
    %1512 = vmatprep.subr.mxu0 %v411
    %1513 = vmatpush1.msra.mxu0 %v410
    %1514 = vmatprep.subr.mxu0 %v415
    %1515 = vmatpush1.msra.mxu0 %v414
    %1516 = vmatprep.subr.mxu0 %v419
    %1517 = vmatpush1.msra.mxu0 %v418
    %1518 = vmatprep.subr.mxu0 %v423
    %1519 = vmatpush1.msra.mxu0 %v422
    %1520 = vmatprep.subr.mxu0 %v427
    %1521 = vmatpush1.msra.mxu0 %v426
    %1522 = vmatprep.subr.mxu0 %v431
    %1523 = vmatpush1.msra.mxu0 %v430
    %1524 = vmatprep.subr.mxu0 %v435
    %1525 = vmatpush1.msra.mxu0 %v434
    %1526 = vmatprep.subr.mxu0 %v439
    %1527 = vmatpush1.msra.mxu0 %v438
    %1528 = vmatprep.subr.mxu0 %v443
    %1529 = vmatpush1.msra.mxu0 %v442
    %1530 = vmatprep.subr.mxu0 %v447
    %1531 = vmatpush1.msra.mxu0 %v446
    %1532 = vmatprep.subr.mxu0 %v451
    %1533 = vmatpush1.msra.mxu0 %v450
    %1534 = vmatprep.subr.mxu0 %v455
    %1535 = vmatpush1.msra.mxu0 %v454
    %1536 = vmatprep.subr.mxu0 %v459
    %1537 = vmatpush1.msra.mxu0 %v458
    %1538 = vmatprep.subr.mxu0 0.0
    %1539 = vmatpush1.msra.mxu0 0.0
    %1540 = vmatprep.subr.mxu0 0.0
    %1541 = vmatpush1.msra.mxu0 0.0
    %1542 = vmatprep.subr.mxu0 0.0
    %1543 = vmatpush1.msra.mxu0 0.0
    %1544 = vmatprep.subr.mxu0 0.0
    %1545 = vmatpush1.msra.mxu0 0.0
    %1546 = vmatprep.subr.mxu0 0.0
    %1547 = vmatpush1.msra.mxu0 0.0
    %1548 = vmatprep.subr.mxu0 0.0
    %1549 = vmatpush1.msra.mxu0 0.0
    %1550 = vmatprep.subr.mxu0 0.0
    %1551 = vmatpush1.msra.mxu0 0.0
    %1552 = vmatprep.subr.mxu0 0.0
    %1553 = vmatpush1.msra.mxu0 0.0
    %1554 = vmatprep.subr.mxu0 0.0
    %1555 = vmatpush1.msra.mxu0 0.0
    %1556 = vmatprep.subr.mxu0 0.0
    %1557 = vmatpush1.msra.mxu0 0.0
    %1558 = vmatprep.subr.mxu0 0.0
    %1559 = vmatpush1.msra.mxu0 0.0
    %1560 = vmatprep.subr.mxu0 0.0
    %1561 = vmatpush1.msra.mxu0 0.0
    %1562 = vmatprep.subr.mxu0 0.0
    %1563 = vmatpush1.msra.mxu0 0.0
    %1564 = vmatprep.subr.mxu0 0.0
    %1565 = vmatpush1.msra.mxu0 0.0
    %1566 = vmatprep.subr.mxu0 0.0
    %1567 = vmatpush1.msra.mxu0 0.0
    %1568 = vmatprep.subr.mxu0 0.0
    %1569 = vmatpush1.msra.mxu0 0.0
    %1570 = vmatprep.mubr.f32.mxu0 0.0
    %1571 = vmatmul.mubr.f32.gmra.mrb[0].mxu0 %v1501
    %v1572 = vpop.f32.mrb[0].mxu0
    %v1573 = vadd.f32 0.0, %v1572
    %v1574 = vpop.f32.mrb[0].mxu0
    %v1575 = vadd.f32 0.0, %v1574
    %1576 = vdwg.mxu0
    %1577 = vmatprep.subr.mxu0 %v401
    %1578 = vmatpush1.msra.mxu0 %v400
    %1579 = vmatprep.subr.mxu0 %v405
    %1580 = vmatpush1.msra.mxu0 %v404
    %1581 = vmatprep.subr.mxu0 %v409
    %1582 = vmatpush1.msra.mxu0 %v408
    %1583 = vmatprep.subr.mxu0 %v413
    %1584 = vmatpush1.msra.mxu0 %v412
    %1585 = vmatprep.subr.mxu0 %v417
    %1586 = vmatpush1.msra.mxu0 %v416
    %1587 = vmatprep.subr.mxu0 %v421
    %1588 = vmatpush1.msra.mxu0 %v420
    %1589 = vmatprep.subr.mxu0 %v425
    %1590 = vmatpush1.msra.mxu0 %v424
    %1591 = vmatprep.subr.mxu0 %v429
    %1592 = vmatpush1.msra.mxu0 %v428
    %1593 = vmatprep.subr.mxu0 %v433
    %1594 = vmatpush1.msra.mxu0 %v432
    %1595 = vmatprep.subr.mxu0 %v437
    %1596 = vmatpush1.msra.mxu0 %v436
    %1597 = vmatprep.subr.mxu0 %v441
    %1598 = vmatpush1.msra.mxu0 %v440
    %1599 = vmatprep.subr.mxu0 %v445
    %1600 = vmatpush1.msra.mxu0 %v444
    %1601 = vmatprep.subr.mxu0 %v449
    %1602 = vmatpush1.msra.mxu0 %v448
    %1603 = vmatprep.subr.mxu0 %v453
    %1604 = vmatpush1.msra.mxu0 %v452
    %1605 = vmatprep.subr.mxu0 %v457
    %1606 = vmatpush1.msra.mxu0 %v456
    %1607 = vmatprep.subr.mxu0 %v461
    %1608 = vmatpush1.msra.mxu0 %v460
    %1609 = vmatprep.subr.mxu0 0.0
    %1610 = vmatpush1.msra.mxu0 0.0
    %1611 = vmatprep.subr.mxu0 0.0
    %1612 = vmatpush1.msra.mxu0 0.0
    %1613 = vmatprep.subr.mxu0 0.0
    %1614 = vmatpush1.msra.mxu0 0.0
    %1615 = vmatprep.subr.mxu0 0.0
    %1616 = vmatpush1.msra.mxu0 0.0
    %1617 = vmatprep.subr.mxu0 0.0
    %1618 = vmatpush1.msra.mxu0 0.0
    %1619 = vmatprep.subr.mxu0 0.0
    %1620 = vmatpush1.msra.mxu0 0.0
    %1621 = vmatprep.subr.mxu0 0.0
    %1622 = vmatpush1.msra.mxu0 0.0
    %1623 = vmatprep.subr.mxu0 0.0
    %1624 = vmatpush1.msra.mxu0 0.0
    %1625 = vmatprep.subr.mxu0 0.0
    %1626 = vmatpush1.msra.mxu0 0.0
    %1627 = vmatprep.subr.mxu0 0.0
    %1628 = vmatpush1.msra.mxu0 0.0
    %1629 = vmatprep.subr.mxu0 0.0
    %1630 = vmatpush1.msra.mxu0 0.0
    %1631 = vmatprep.subr.mxu0 0.0
    %1632 = vmatpush1.msra.mxu0 0.0
    %1633 = vmatprep.subr.mxu0 0.0
    %1634 = vmatpush1.msra.mxu0 0.0
    %1635 = vmatprep.subr.mxu0 0.0
    %1636 = vmatpush1.msra.mxu0 0.0
    %1637 = vmatprep.subr.mxu0 0.0
    %1638 = vmatpush1.msra.mxu0 0.0
    %1639 = vmatprep.subr.mxu0 0.0
    %1640 = vmatpush1.msra.mxu0 0.0
    %1641 = vmatprep.mubr.f32.mxu0 0.0
    %1642 = vmatmul.mubr.f32.gmra.mrb[0].mxu0 %v1501
    %v1643 = vpop.f32.mrb[0].mxu0
    %v1644 = vadd.f32 0.0, %v1643
    %v1645 = vpop.f32.mrb[0].mxu0
    %v1646 = vadd.f32 0.0, %v1645
    %1647 = vdwg.mxu0
    %v1648 = vadd.f32 %v1502, %v1573
    %v1649 = vadd.f32 %v1503, %v1575
    %v1650 = vadd.f32 %v1504, %v1644
    %v1651 = vadd.f32 %v1505, %v1646
    %v1652 = vxor.u32 %v1648, 2147483648
    %v1653 = vmul.f32 %v1652, 1.442695
    %v1654 = vpow.pop %v1653
    %v1655 = vadd.f32 %v1654, 1.0
    %v1656 = vrcp.pop %v1655
    %v1657 = vmul.f32 1.0, %v1656
    %v1658 = vxor.u32 %v1649, 2147483648
    %v1659 = vmul.f32 %v1658, 1.442695
    %v1660 = vpow.pop %v1659
    %v1661 = vadd.f32 %v1660, 1.0
    %v1662 = vrcp.pop %v1661
    %v1663 = vmul.f32 1.0, %v1662
    %v1664 = vtanh.pop %v1650
    %v1665 = vxor.u32 %v1651, 2147483648
    %v1666 = vmul.f32 %v1665, 1.442695
    %v1667 = vpow.pop %v1666
    %v1668 = vadd.f32 %v1667, 1.0
    %v1669 = vrcp.pop %v1668
    %v1670 = vmul.f32 1.0, %v1669
    %v1671 = vmul.f32 %v1663, %v1499
    %v1672 = vmul.f32 %v1657, %v1664
    %v1673 = vadd.f32 %v1671, %v1672
    %v1674 = vtanh.pop %v1673
    %v1675 = vmul.f32 %v1670, %v1674
    %v1676 = vld [vmem:[#allocation2 + $0xe0] sm:$0xff]
    %v1677 = vld [vmem:[#allocation2 + $0xe8] sm:$0xff]
    %v1678 = vld [vmem:[#allocation2 + $0xf0] sm:$0xff]
    %v1679 = vld [vmem:[#allocation2 + $0xf8] sm:$0xff]
    %1680 = vmatprep.subr.mxu0 %v399
    %1681 = vmatpush1.msra.mxu0 %v398
    %1682 = vmatprep.subr.mxu0 %v403
    %1683 = vmatpush1.msra.mxu0 %v402
    %1684 = vmatprep.subr.mxu0 %v407
    %1685 = vmatpush1.msra.mxu0 %v406
    %1686 = vmatprep.subr.mxu0 %v411
    %1687 = vmatpush1.msra.mxu0 %v410
    %1688 = vmatprep.subr.mxu0 %v415
    %1689 = vmatpush1.msra.mxu0 %v414
    %1690 = vmatprep.subr.mxu0 %v419
    %1691 = vmatpush1.msra.mxu0 %v418
    %1692 = vmatprep.subr.mxu0 %v423
    %1693 = vmatpush1.msra.mxu0 %v422
    %1694 = vmatprep.subr.mxu0 %v427
    %1695 = vmatpush1.msra.mxu0 %v426
    %1696 = vmatprep.subr.mxu0 %v431
    %1697 = vmatpush1.msra.mxu0 %v430
    %1698 = vmatprep.subr.mxu0 %v435
    %1699 = vmatpush1.msra.mxu0 %v434
    %1700 = vmatprep.subr.mxu0 %v439
    %1701 = vmatpush1.msra.mxu0 %v438
    %1702 = vmatprep.subr.mxu0 %v443
    %1703 = vmatpush1.msra.mxu0 %v442
    %1704 = vmatprep.subr.mxu0 %v447
    %1705 = vmatpush1.msra.mxu0 %v446
    %1706 = vmatprep.subr.mxu0 %v451
    %1707 = vmatpush1.msra.mxu0 %v450
    %1708 = vmatprep.subr.mxu0 %v455
    %1709 = vmatpush1.msra.mxu0 %v454
    %1710 = vmatprep.subr.mxu0 %v459
    %1711 = vmatpush1.msra.mxu0 %v458
    %1712 = vmatprep.subr.mxu0 0.0
    %1713 = vmatpush1.msra.mxu0 0.0
    %1714 = vmatprep.subr.mxu0 0.0
    %1715 = vmatpush1.msra.mxu0 0.0
    %1716 = vmatprep.subr.mxu0 0.0
    %1717 = vmatpush1.msra.mxu0 0.0
    %1718 = vmatprep.subr.mxu0 0.0
    %1719 = vmatpush1.msra.mxu0 0.0
    %1720 = vmatprep.subr.mxu0 0.0
    %1721 = vmatpush1.msra.mxu0 0.0
    %1722 = vmatprep.subr.mxu0 0.0
    %1723 = vmatpush1.msra.mxu0 0.0
    %1724 = vmatprep.subr.mxu0 0.0
    %1725 = vmatpush1.msra.mxu0 0.0
    %1726 = vmatprep.subr.mxu0 0.0
    %1727 = vmatpush1.msra.mxu0 0.0
    %1728 = vmatprep.subr.mxu0 0.0
    %1729 = vmatpush1.msra.mxu0 0.0
    %1730 = vmatprep.subr.mxu0 0.0
    %1731 = vmatpush1.msra.mxu0 0.0
    %1732 = vmatprep.subr.mxu0 0.0
    %1733 = vmatpush1.msra.mxu0 0.0
    %1734 = vmatprep.subr.mxu0 0.0
    %1735 = vmatpush1.msra.mxu0 0.0
    %1736 = vmatprep.subr.mxu0 0.0
    %1737 = vmatpush1.msra.mxu0 0.0
    %1738 = vmatprep.subr.mxu0 0.0
    %1739 = vmatpush1.msra.mxu0 0.0
    %1740 = vmatprep.subr.mxu0 0.0
    %1741 = vmatpush1.msra.mxu0 0.0
    %1742 = vmatprep.subr.mxu0 0.0
    %1743 = vmatpush1.msra.mxu0 0.0
    %1744 = vmatprep.mubr.f32.mxu0 0.0
    %1745 = vmatmul.mubr.f32.gmra.mrb[0].mxu0 %v1675
    %v1746 = vpop.f32.mrb[0].mxu0
    %v1747 = vadd.f32 0.0, %v1746
    %v1748 = vpop.f32.mrb[0].mxu0
    %v1749 = vadd.f32 0.0, %v1748
    %1750 = vdwg.mxu0
    %1751 = vmatprep.subr.mxu0 %v401
    %1752 = vmatpush1.msra.mxu0 %v400
    %1753 = vmatprep.subr.mxu0 %v405
    %1754 = vmatpush1.msra.mxu0 %v404
    %1755 = vmatprep.subr.mxu0 %v409
    %1756 = vmatpush1.msra.mxu0 %v408
    %1757 = vmatprep.subr.mxu0 %v413
    %1758 = vmatpush1.msra.mxu0 %v412
    %1759 = vmatprep.subr.mxu0 %v417
    %1760 = vmatpush1.msra.mxu0 %v416
    %1761 = vmatprep.subr.mxu0 %v421
    %1762 = vmatpush1.msra.mxu0 %v420
    %1763 = vmatprep.subr.mxu0 %v425
    %1764 = vmatpush1.msra.mxu0 %v424
    %1765 = vmatprep.subr.mxu0 %v429
    %1766 = vmatpush1.msra.mxu0 %v428
    %1767 = vmatprep.subr.mxu0 %v433
    %1768 = vmatpush1.msra.mxu0 %v432
    %1769 = vmatprep.subr.mxu0 %v437
    %1770 = vmatpush1.msra.mxu0 %v436
    %1771 = vmatprep.subr.mxu0 %v441
    %1772 = vmatpush1.msra.mxu0 %v440
    %1773 = vmatprep.subr.mxu0 %v445
    %1774 = vmatpush1.msra.mxu0 %v444
    %1775 = vmatprep.subr.mxu0 %v449
    %1776 = vmatpush1.msra.mxu0 %v448
    %1777 = vmatprep.subr.mxu0 %v453
    %1778 = vmatpush1.msra.mxu0 %v452
    %1779 = vmatprep.subr.mxu0 %v457
    %1780 = vmatpush1.msra.mxu0 %v456
    %1781 = vmatprep.subr.mxu0 %v461
    %1782 = vmatpush1.msra.mxu0 %v460
    %1783 = vmatprep.subr.mxu0 0.0
    %1784 = vmatpush1.msra.mxu0 0.0
    %1785 = vmatprep.subr.mxu0 0.0
    %1786 = vmatpush1.msra.mxu0 0.0
    %1787 = vmatprep.subr.mxu0 0.0
    %1788 = vmatpush1.msra.mxu0 0.0
    %1789 = vmatprep.subr.mxu0 0.0
    %1790 = vmatpush1.msra.mxu0 0.0
    %1791 = vmatprep.subr.mxu0 0.0
    %1792 = vmatpush1.msra.mxu0 0.0
    %1793 = vmatprep.subr.mxu0 0.0
    %1794 = vmatpush1.msra.mxu0 0.0
    %1795 = vmatprep.subr.mxu0 0.0
    %1796 = vmatpush1.msra.mxu0 0.0
    %1797 = vmatprep.subr.mxu0 0.0
    %1798 = vmatpush1.msra.mxu0 0.0
    %1799 = vmatprep.subr.mxu0 0.0
    %1800 = vmatpush1.msra.mxu0 0.0
    %1801 = vmatprep.subr.mxu0 0.0
    %1802 = vmatpush1.msra.mxu0 0.0
    %1803 = vmatprep.subr.mxu0 0.0
    %1804 = vmatpush1.msra.mxu0 0.0
    %1805 = vmatprep.subr.mxu0 0.0
    %1806 = vmatpush1.msra.mxu0 0.0
    %1807 = vmatprep.subr.mxu0 0.0
    %1808 = vmatpush1.msra.mxu0 0.0
    %1809 = vmatprep.subr.mxu0 0.0
    %1810 = vmatpush1.msra.mxu0 0.0
    %1811 = vmatprep.subr.mxu0 0.0
    %1812 = vmatpush1.msra.mxu0 0.0
    %1813 = vmatprep.subr.mxu0 0.0
    %1814 = vmatpush1.msra.mxu0 0.0
    %1815 = vmatprep.mubr.f32.mxu0 0.0
    %1816 = vmatmul.mubr.f32.gmra.mrb[0].mxu0 %v1675
    %v1817 = vpop.f32.mrb[0].mxu0
    %v1818 = vadd.f32 0.0, %v1817
    %v1819 = vpop.f32.mrb[0].mxu0
    %v1820 = vadd.f32 0.0, %v1819
    %1821 = vdwg.mxu0
    %v1822 = vadd.f32 %v1676, %v1747
    %v1823 = vadd.f32 %v1677, %v1749
    %v1824 = vadd.f32 %v1678, %v1818
    %v1825 = vadd.f32 %v1679, %v1820
    %v1826 = vxor.u32 %v1822, 2147483648
    %v1827 = vmul.f32 %v1826, 1.442695
    %v1828 = vpow.pop %v1827
    %v1829 = vadd.f32 %v1828, 1.0
    %v1830 = vrcp.pop %v1829
    %v1831 = vmul.f32 1.0, %v1830
    %v1832 = vxor.u32 %v1823, 2147483648
    %v1833 = vmul.f32 %v1832, 1.442695
    %v1834 = vpow.pop %v1833
    %v1835 = vadd.f32 %v1834, 1.0
    %v1836 = vrcp.pop %v1835
    %v1837 = vmul.f32 1.0, %v1836
    %v1838 = vtanh.pop %v1824
    %v1839 = vxor.u32 %v1825, 2147483648
    %v1840 = vmul.f32 %v1839, 1.442695
    %v1841 = vpow.pop %v1840
    %v1842 = vadd.f32 %v1841, 1.0
    %v1843 = vrcp.pop %v1842
    %v1844 = vmul.f32 1.0, %v1843
    %v1845 = vmul.f32 %v1837, %v1673
    %v1846 = vmul.f32 %v1831, %v1838
    %v1847 = vadd.f32 %v1845, %v1846
    %v1848 = vtanh.pop %v1847
    %v1849 = vmul.f32 %v1844, %v1848
    %v1850 = vmax.f32 %v1849, 0.0
    %v1851 = vld [vmem:[#allocation8] sm:$0xff]
    %v1852 = vld [vmem:[#allocation8 + $0x8] sm:$0xff]
    %v1853 = vld [vmem:[#allocation8 + $0x10] sm:$0xff]
    %v1854 = vld [vmem:[#allocation8 + $0x18] sm:$0xff]
    %v1855 = vld [vmem:[#allocation8 + $0x20] sm:$0xff]
    %v1856 = vld [vmem:[#allocation8 + $0x28] sm:$0xff]
    %v1857 = vld [vmem:[#allocation8 + $0x30] sm:$0xff]
    %v1858 = vld [vmem:[#allocation8 + $0x38] sm:$0xff]
    %v1859 = vld [vmem:[#allocation8 + $0x40] sm:$0xff]
    %v1860 = vld [vmem:[#allocation8 + $0x48] sm:$0xff]
    %v1861 = vld [vmem:[#allocation8 + $0x50] sm:$0xff]
    %v1862 = vld [vmem:[#allocation8 + $0x58] sm:$0xff]
    %v1863 = vld [vmem:[#allocation8 + $0x60] sm:$0xff]
    %v1864 = vld [vmem:[#allocation8 + $0x68] sm:$0xff]
    %v1865 = vld [vmem:[#allocation8 + $0x70] sm:$0xff]
    %v1866 = vld [vmem:[#allocation8 + $0x78] sm:$0xff]
    %v1867 = vld [vmem:[%s5] sm:$0x1]
    %v1869 = vlaneseq
    %v1870 = vshrl.u32 %v1869, 7
    %v1871 = vsub.s32 0, %v1870
    %v1872 = vrot.slane %v1867, %v1871
    %1874 = vmatprep.subr.mxu0 0.0
    %1875 = vmatpush1.msra.mxu0 %v1851
    %1876 = vmatprep.subr.mxu0 0.0
    %1877 = vmatpush1.msra.mxu0 %v1852
    %1878 = vmatprep.subr.mxu0 0.0
    %1879 = vmatpush1.msra.mxu0 %v1853
    %1880 = vmatprep.subr.mxu0 0.0
    %1881 = vmatpush1.msra.mxu0 %v1854
    %1882 = vmatprep.subr.mxu0 0.0
    %1883 = vmatpush1.msra.mxu0 %v1855
    %1884 = vmatprep.subr.mxu0 0.0
    %1885 = vmatpush1.msra.mxu0 %v1856
    %1886 = vmatprep.subr.mxu0 0.0
    %1887 = vmatpush1.msra.mxu0 %v1857
    %1888 = vmatprep.subr.mxu0 0.0
    %1889 = vmatpush1.msra.mxu0 %v1858
    %1890 = vmatprep.subr.mxu0 0.0
    %1891 = vmatpush1.msra.mxu0 %v1859
    %1892 = vmatprep.subr.mxu0 0.0
    %1893 = vmatpush1.msra.mxu0 %v1860
    %1894 = vmatprep.subr.mxu0 0.0
    %1895 = vmatpush1.msra.mxu0 %v1861
    %1896 = vmatprep.subr.mxu0 0.0
    %1897 = vmatpush1.msra.mxu0 %v1862
    %1898 = vmatprep.subr.mxu0 0.0
    %1899 = vmatpush1.msra.mxu0 %v1863
    %1900 = vmatprep.subr.mxu0 0.0
    %1901 = vmatpush1.msra.mxu0 %v1864
    %1902 = vmatprep.subr.mxu0 0.0
    %1903 = vmatpush1.msra.mxu0 %v1865
    %1904 = vmatprep.subr.mxu0 0.0
    %1905 = vmatpush1.msra.mxu0 %v1866
    %1906 = vmatprep.subr.mxu0 0.0
    %1907 = vmatpush1.msra.mxu0 0.0
    %1908 = vmatprep.subr.mxu0 0.0
    %1909 = vmatpush1.msra.mxu0 0.0
    %1910 = vmatprep.subr.mxu0 0.0
    %1911 = vmatpush1.msra.mxu0 0.0
    %1912 = vmatprep.subr.mxu0 0.0
    %1913 = vmatpush1.msra.mxu0 0.0
    %1914 = vmatprep.subr.mxu0 0.0
    %1915 = vmatpush1.msra.mxu0 0.0
    %1916 = vmatprep.subr.mxu0 0.0
    %1917 = vmatpush1.msra.mxu0 0.0
    %1918 = vmatprep.subr.mxu0 0.0
    %1919 = vmatpush1.msra.mxu0 0.0
    %1920 = vmatprep.subr.mxu0 0.0
    %1921 = vmatpush1.msra.mxu0 0.0
    %1922 = vmatprep.subr.mxu0 0.0
    %1923 = vmatpush1.msra.mxu0 0.0
    %1924 = vmatprep.subr.mxu0 0.0
    %1925 = vmatpush1.msra.mxu0 0.0
    %1926 = vmatprep.subr.mxu0 0.0
    %1927 = vmatpush1.msra.mxu0 0.0
    %1928 = vmatprep.subr.mxu0 0.0
    %1929 = vmatpush1.msra.mxu0 0.0
    %1930 = vmatprep.subr.mxu0 0.0
    %1931 = vmatpush1.msra.mxu0 0.0
    %1932 = vmatprep.subr.mxu0 0.0
    %1933 = vmatpush1.msra.mxu0 0.0
    %1934 = vmatprep.subr.mxu0 0.0
    %1935 = vmatpush1.msra.mxu0 0.0
    %1936 = vmatprep.subr.mxu0 0.0
    %1937 = vmatpush1.msra.mxu0 0.0
    %1938 = vmatprep.mubr.f32.mxu0 0.0
    %1939 = vmatmul.mubr.f32.gmra.mrb[0].mxu0 %v1850
    %v1940 = vpop.f32.mrb[0].mxu0
    %v1941 = vadd.f32 %v1872, %v1940
    %v1942 = vpop.f32.mrb[0].mxu0
    %1943 = vdwg.mxu0
    %1944 = vst [vmem:[#allocation9] sm:$0xff] %v1941
    // Predicated region
    $region38: #{tpu_custom_call.1} parent=1 // pred_check
      _
    $region39: #{tpu_custom_call.1} parent=1 // pred_check_branch
      %1946 = sbr.rel (0) target = $region41
    $region40: #{tpu_custom_call.1} parent=1 // pred_region
      %s1948 = ssub.s32 128, 128
      %1949 = vsyncadd [#allocation5], %s1948
      %s1951 = sshll.u32 [#allocation9], 4
      %s1952 = int_to_ptr.vmem [resolvable:$true] %s1951
      %1954 = dma.vmem_to_hbm [thread:$0]  %s1952, 128, %s6, [#allocation5]
    $region41: #{tpu_custom_call.1} parent=1 // pred_fallthru
      _
    // Predicated region
    $region42: #{tpu_custom_call.1} parent=1 // pred_check
      _
    $region43: #{tpu_custom_call.1} parent=1 // pred_check_branch
      %1956 = sbr.rel (0) target = $region45
    $region44: #{tpu_custom_call.1} parent=1 // pred_region
      %1957 = dma.done [#allocation5], 128
    $region45: #{tpu_custom_call.1} parent=1 // pred_fallthru
      _
    %1958 = vsyncpa [#allocation4], 1
    %1959 = vsyncpa [#allocation7], 1
    %1960 = vsyncpa [#allocation5], 1

</llo_original>
